<compile_context>
chip_gen: v5e
topology: v5e:2x2
jax: 0.10.0
libtpu: 0.0.40
codegen_flags: <defaults>
</compile_context>

<pallas_src>
import jax
import jax.numpy as jnp
from jax.experimental import pallas as pl
from jax.experimental.pallas import tpu as pltpu


# ----------------------------------------------------------------------------
# Fused kernel: im2col conv dot + bias + ReLU + MXU global-avg-pool + projection head.
# One grid step handles a tile of `Bt` images (M = Bt*H*W rows).
#   xk_ref   : (Bt*H*W, 27)   bf16   full im2col patches (ky,kx,cin unrolled in the wrapper)
#   wk_ref   : (27, Cf)       bf16   conv weight, flattened to match the patch ordering
#   cb_ref   : (1, Cf)        f32    conv bias
#   pool_ref : (Bt, Bt*H*W)   bf16   block-diagonal mean-pool matrix (1/HW entries, exact)
#   w1_ref   : (Cf, Hd) bf16,  b1_ref : (1, Hd) f32
#   w2_ref   : (Hd, Od) bf16,  b2_ref : (1, Od) f32
#   h_ref    : (Bt, Cf) f32    pooled backbone features
#   z_ref    : (Bt, Od) f32    projection head output
# ----------------------------------------------------------------------------
def _simclr_kernel(xk_ref, wk_ref, cb_ref, pool_ref, w1_ref, b1_ref, w2_ref, b2_ref,
                   h_ref, z_ref):
    # --- backbone conv: one K=27 MXU dot (bf16 operands, f32 accumulation) ---
    y = jnp.dot(xk_ref[...], wk_ref[...], preferred_element_type=jnp.float32)  # (M, Cf)
    # bias + ReLU in f32
    y = jnp.maximum(y + cb_ref[...], 0.0)

    # --- global average pool per image on the MXU (bf16 x bf16, f32 acc) ---
    h_tile = jnp.dot(pool_ref[...], y.astype(jnp.bfloat16),
                     preferred_element_type=jnp.float32)                        # (Bt, Cf)
    h_ref[...] = h_tile

    # --- fused projection head: Linear -> ReLU -> Linear (bf16 operands, f32 acc) ---
    a1 = jnp.dot(h_tile.astype(jnp.bfloat16), w1_ref[...],
                 preferred_element_type=jnp.float32) + b1_ref[...]
    a1 = jnp.maximum(a1, 0.0)
    z = jnp.dot(a1.astype(jnp.bfloat16), w2_ref[...],
                preferred_element_type=jnp.float32) + b2_ref[...]
    z_ref[...] = z


def simclr_forward(x_nchw, params, *, batch_tile=8):
    """Returns (h, z) exactly like the PyTorch module's forward."""
    conv_w, conv_b, w1, b1, w2, b2 = params
    B, Cin, H, W = x_nchw.shape
    Cf = conv_w.shape[0]            # conv out channels == last_conv_output_dim
    Hd = w1.shape[1]                # 512
    Od = w2.shape[1]                # out_dim
    HW = H * W
    K27 = 9 * Cin
    Bt = batch_tile
    assert B % Bt == 0, "batch must be a multiple of the batch tile"

    # --- glue: NCHW -> NHWC, pad=1, full im2col (ky, kx, cin) in bf16 -> (B*HW, 27) ---
    x = jnp.transpose(x_nchw, (0, 2, 3, 1)).astype(jnp.float32)        # (B, H, W, Cin)
    xp = jnp.pad(x, ((0, 0), (1, 1), (1, 1), (0, 0)))                  # (B, H+2, W+2, Cin)
    xk = jnp.concatenate(
        [xp[:, dy:dy + H, dx:dx + W, :] for dy in range(3) for dx in range(3)],
        axis=-1)                                                       # (B, H, W, 9*Cin)
    xk = xk.reshape(B * HW, K27).astype(jnp.bfloat16)

    # conv weight (Cf, Cin, 3, 3) -> (ky, kx, cin, Cf) -> (27, Cf); matches patch ordering
    wk = jnp.transpose(conv_w, (2, 3, 1, 0)).reshape(K27, Cf).astype(jnp.bfloat16)
    cb = conv_b.reshape(1, Cf).astype(jnp.float32)

    # block-diagonal mean-pool matrix in bf16: pool[i, b*HW + r] = 1/HW if b == i else 0
    # (1/HW is a power of two here, exact in bf16)
    pool = (jnp.repeat(jnp.eye(Bt, dtype=jnp.float32), HW, axis=1) / float(HW)
            ).astype(jnp.bfloat16)                                     # (Bt, Bt*HW)

    # advisory cost hint for XLA's scheduler around the custom call
    flops = (2 * B * HW * K27 * Cf          # conv
             + 2 * B * Bt * HW * Cf         # pool matmul
             + 2 * B * Cf * Hd              # head layer 1
             + 2 * B * Hd * Od)             # head layer 2
    bytes_accessed = (xk.size * 2 + wk.size * 2 + pool.size * 2
                      + Cf * Hd * 2 + Hd * Od * 2
                      + (Cf + Hd + Od) * 4
                      + B * Cf * 4 + B * Od * 4)
    cost = pl.CostEstimate(flops=flops, transcendentals=0, bytes_accessed=bytes_accessed)

    h, z = pl.pallas_call(
        _simclr_kernel,
        out_shape=(jax.ShapeDtypeStruct((B, Cf), jnp.float32),
                   jax.ShapeDtypeStruct((B, Od), jnp.float32)),
        grid_spec=pltpu.PrefetchScalarGridSpec(
            num_scalar_prefetch=0,
            grid=(B // Bt,),
            in_specs=[
                pl.BlockSpec((Bt * HW, K27), lambda b: (b, 0)),        # im2col patch tile
                pl.BlockSpec((K27, Cf), lambda b: (0, 0)),             # conv weight (resident)
                pl.BlockSpec((1, Cf), lambda b: (0, 0)),               # conv bias
                pl.BlockSpec((Bt, Bt * HW), lambda b: (0, 0)),         # pool matrix (resident)
                pl.BlockSpec((Cf, Hd), lambda b: (0, 0)),              # w1 (resident)
                pl.BlockSpec((1, Hd), lambda b: (0, 0)),               # b1
                pl.BlockSpec((Hd, Od), lambda b: (0, 0)),              # w2 (resident)
                pl.BlockSpec((1, Od), lambda b: (0, 0)),               # b2
            ],
            out_specs=[
                pl.BlockSpec((Bt, Cf), lambda b: (b, 0)),              # h tile (8,128) aligned
                pl.BlockSpec((Bt, Od), lambda b: (b, 0)),              # z tile (8,128) aligned
            ],
        ),
        compiler_params=pltpu.CompilerParams(
            dimension_semantics=("parallel",),        # batch-tile axis shards across TCs
            vmem_limit_bytes=16 * 1024 * 1024,        # actual usage is a few MiB
        ),
        cost_estimate=cost,
    )(xk, wk, cb, pool,
      w1.astype(jnp.bfloat16), b1.reshape(1, Hd).astype(jnp.float32),
      w2.astype(jnp.bfloat16), b2.reshape(1, Od).astype(jnp.float32))

    return h, z


def simclr_reference(x_nchw, params):
    """Pure-JAX f32 reference of the same forward, for a correctness sanity check."""
    conv_w, conv_b, w1, b1, w2, b2 = params
    y = jax.lax.conv_general_dilated(
        x_nchw.astype(jnp.float32), conv_w,
        window_strides=(1, 1), padding="SAME",
        dimension_numbers=("NCHW", "OIHW", "NCHW"),
    ) + conv_b[None, :, None, None]
    y = jnp.maximum(y, 0.0)
    h = jnp.mean(y, axis=(2, 3))                      # global avg pool + squeeze -> (B, Cf)
    a = jnp.maximum(h @ w1 + b1, 0.0)
    z = a @ w2 + b2
    return h, z


def init_params(key, cin=3, c_feat=128, hidden=512, out_dim=128):
    ks = jax.random.split(key, 6)
    conv_w = jax.random.normal(ks[0], (c_feat, cin, 3, 3), jnp.float32) * 0.1
    conv_b = jax.random.normal(ks[1], (c_feat,), jnp.float32) * 0.1
    w1 = jax.random.normal(ks[2], (c_feat, hidden), jnp.float32) * 0.05
    b1 = jax.random.normal(ks[3], (hidden,), jnp.float32) * 0.05
    w2 = jax.random.normal(ks[4], (hidden, out_dim), jnp.float32) * 0.05
    b2 = jax.random.normal(ks[5], (out_dim,), jnp.float32) * 0.05
    return conv_w, conv_b, w1, b1, w2, b2


if __name__ == "__main__":
    key = jax.random.PRNGKey(0)
    k_x, k_p = jax.random.split(key)

    B, Cin, H, W = 16, 3, 16, 16                      # 2 grid steps of 8 images each
    params = init_params(k_p, cin=Cin, c_feat=128, hidden=512, out_dim=128)
    x = jax.random.normal(k_x, (B, Cin, H, W), jnp.float32)

    h, z = jax.jit(simclr_forward)(x, params)
    jax.block_until_ready((h, z))

    h_ref, z_ref = simclr_reference(x, params)
    assert h.shape == (B, 128) and z.shape == (B, 128)
    # bf16 matmul operands with f32 accumulation -> compare against the f32 reference loosely.
    assert jnp.allclose(h, h_ref, atol=2e-2, rtol=2e-2)
    assert jnp.allclose(z, z_ref, atol=3e-2, rtol=3e-2)

    print("KERNEL_OK")
</pallas_src>

<mosaic_0001>
module attributes {stable_mosaic.version = 11 : i64} {
  func.func @_simclr_kernel(%arg0: i32, %arg1: memref<2048x27xbf16, #tpu.memory_space<vmem>>, %arg2: memref<27x128xbf16, #tpu.memory_space<vmem>>, %arg3: memref<1x128xf32, #tpu.memory_space<vmem>>, %arg4: memref<8x2048xbf16, #tpu.memory_space<vmem>>, %arg5: memref<128x512xbf16, #tpu.memory_space<vmem>>, %arg6: memref<1x512xf32, #tpu.memory_space<vmem>>, %arg7: memref<512x128xbf16, #tpu.memory_space<vmem>>, %arg8: memref<1x128xf32, #tpu.memory_space<vmem>>, %arg9: memref<8x128xf32, #tpu.memory_space<vmem>>, %arg10: memref<8x128xf32, #tpu.memory_space<vmem>>) attributes {dimension_semantics = [#tpu.dimension_semantics<parallel>], iteration_bounds = array<i64: 2>, scalar_prefetch = 0 : i64, scratch_operands = 0 : i64, tpu.core_type = #tpu.core_type<tc>, window_params = [{transform_indices = @transform_0, window_bounds = array<i64: 2048, 27>}, {pipeline_mode = #tpu.pipeline_mode<synchronous>, transform_indices = @transform_1, window_bounds = array<i64: 27, 128>}, {pipeline_mode = #tpu.pipeline_mode<synchronous>, transform_indices = @transform_2, window_bounds = array<i64: 1, 128>}, {pipeline_mode = #tpu.pipeline_mode<synchronous>, transform_indices = @transform_3, window_bounds = array<i64: 8, 2048>}, {pipeline_mode = #tpu.pipeline_mode<synchronous>, transform_indices = @transform_4, window_bounds = array<i64: 128, 512>}, {pipeline_mode = #tpu.pipeline_mode<synchronous>, transform_indices = @transform_5, window_bounds = array<i64: 1, 512>}, {pipeline_mode = #tpu.pipeline_mode<synchronous>, transform_indices = @transform_6, window_bounds = array<i64: 512, 128>}, {pipeline_mode = #tpu.pipeline_mode<synchronous>, transform_indices = @transform_7, window_bounds = array<i64: 1, 128>}, {transform_indices = @transform_8, window_bounds = array<i64: 8, 128>}, {transform_indices = @transform_9, window_bounds = array<i64: 8, 128>}]} {
    %c0 = arith.constant 0 : index
    %c0_0 = arith.constant 0 : index
    %0 = vector.load %arg1[%c0, %c0_0] : memref<2048x27xbf16, #tpu.memory_space<vmem>>, vector<2048x27xbf16>
    %c0_1 = arith.constant 0 : index
    %c0_2 = arith.constant 0 : index
    %1 = vector.load %arg2[%c0_1, %c0_2] : memref<27x128xbf16, #tpu.memory_space<vmem>>, vector<27x128xbf16>
    %cst = arith.constant dense<0.000000e+00> : vector<2048x128xf32>
    %2 = tpu.matmul %0, %1, %cst {dimension_numbers = #tpu.dot_dimension_numbers<[1], [0], [0], [1], [0, 0, 1, 1], [], []>} : vector<2048x27xbf16>, vector<27x128xbf16>, vector<2048x128xf32> -> vector<2048x128xf32>
    %c0_3 = arith.constant 0 : index
    %c0_4 = arith.constant 0 : index
    %3 = vector.load %arg3[%c0_3, %c0_4] : memref<1x128xf32, #tpu.memory_space<vmem>>, vector<1x128xf32>
    %4 = vector.broadcast %3 : vector<1x128xf32> to vector<2048x128xf32>
    %5 = arith.addf %2, %4 : vector<2048x128xf32>
    %cst_5 = arith.constant 0.000000e+00 : f32
    %6 = vector.broadcast %cst_5 : f32 to vector<2048x128xf32>
    %7 = arith.maximumf %5, %6 : vector<2048x128xf32>
    %c0_6 = arith.constant 0 : index
    %c0_7 = arith.constant 0 : index
    %8 = vector.load %arg4[%c0_6, %c0_7] : memref<8x2048xbf16, #tpu.memory_space<vmem>>, vector<8x2048xbf16>
    %9 = arith.truncf %7 : vector<2048x128xf32> to vector<2048x128xbf16>
    %cst_8 = arith.constant dense<0.000000e+00> : vector<8x128xf32>
    %10 = tpu.matmul %8, %9, %cst_8 {dimension_numbers = #tpu.dot_dimension_numbers<[1], [0], [0], [1], [0, 0, 1, 1], [], []>} : vector<8x2048xbf16>, vector<2048x128xbf16>, vector<8x128xf32> -> vector<8x128xf32>
    %c0_9 = arith.constant 0 : index
    %c0_10 = arith.constant 0 : index
    %11 = vector.load %arg9[%c0_9, %c0_10] : memref<8x128xf32, #tpu.memory_space<vmem>>, vector<8x128xf32>
    tpu.vector_store %arg9[%c0_9, %c0_10], %10 {strides = array<i32>} : memref<8x128xf32, #tpu.memory_space<vmem>>, vector<8x128xf32>,
    %12 = arith.truncf %10 : vector<8x128xf32> to vector<8x128xbf16>
    %c0_11 = arith.constant 0 : index
    %c0_12 = arith.constant 0 : index
    %13 = vector.load %arg5[%c0_11, %c0_12] : memref<128x512xbf16, #tpu.memory_space<vmem>>, vector<128x512xbf16>
    %cst_13 = arith.constant dense<0.000000e+00> : vector<8x512xf32>
    %14 = tpu.matmul %12, %13, %cst_13 {dimension_numbers = #tpu.dot_dimension_numbers<[1], [0], [0], [1], [0, 0, 1, 1], [], []>} : vector<8x128xbf16>, vector<128x512xbf16>, vector<8x512xf32> -> vector<8x512xf32>
    %c0_14 = arith.constant 0 : index
    %c0_15 = arith.constant 0 : index
    %15 = vector.load %arg6[%c0_14, %c0_15] : memref<1x512xf32, #tpu.memory_space<vmem>>, vector<1x512xf32>
    %16 = vector.broadcast %15 : vector<1x512xf32> to vector<8x512xf32>
    %17 = arith.addf %14, %16 : vector<8x512xf32>
    %cst_16 = arith.constant 0.000000e+00 : f32
    %18 = vector.broadcast %cst_16 : f32 to vector<8x512xf32>
    %19 = arith.maximumf %17, %18 : vector<8x512xf32>
    %20 = arith.truncf %19 : vector<8x512xf32> to vector<8x512xbf16>
    %c0_17 = arith.constant 0 : index
    %c0_18 = arith.constant 0 : index
    %21 = vector.load %arg7[%c0_17, %c0_18] : memref<512x128xbf16, #tpu.memory_space<vmem>>, vector<512x128xbf16>
    %cst_19 = arith.constant dense<0.000000e+00> : vector<8x128xf32>
    %22 = tpu.matmul %20, %21, %cst_19 {dimension_numbers = #tpu.dot_dimension_numbers<[1], [0], [0], [1], [0, 0, 1, 1], [], []>} : vector<8x512xbf16>, vector<512x128xbf16>, vector<8x128xf32> -> vector<8x128xf32>
    %c0_20 = arith.constant 0 : index
    %c0_21 = arith.constant 0 : index
    %23 = vector.load %arg8[%c0_20, %c0_21] : memref<1x128xf32, #tpu.memory_space<vmem>>, vector<1x128xf32>
    %24 = vector.broadcast %23 : vector<1x128xf32> to vector<8x128xf32>
    %25 = arith.addf %22, %24 : vector<8x128xf32>
    %c0_22 = arith.constant 0 : index
    %c0_23 = arith.constant 0 : index
    %26 = vector.load %arg10[%c0_22, %c0_23] : memref<8x128xf32, #tpu.memory_space<vmem>>, vector<8x128xf32>
    tpu.vector_store %arg10[%c0_22, %c0_23], %25 {strides = array<i32>} : memref<8x128xf32, #tpu.memory_space<vmem>>, vector<8x128xf32>,
    return
  }
  func.func @transform_0(%arg0: i32) -> (i32, i32) {
    %c0_i32 = arith.constant 0 : i32
    %c0_i32_0 = arith.constant 0 : i32
    return %arg0, %c0_i32 : i32, i32
  }
  func.func @transform_1(%arg0: i32) -> (i32, i32) {
    %c0_i32 = arith.constant 0 : i32
    %c0_i32_0 = arith.constant 0 : i32
    %c0_i32_1 = arith.constant 0 : i32
    return %c0_i32, %c0_i32_0 : i32, i32
  }
  func.func @transform_2(%arg0: i32) -> (i32, i32) {
    %c0_i32 = arith.constant 0 : i32
    %c0_i32_0 = arith.constant 0 : i32
    %c0_i32_1 = arith.constant 0 : i32
    return %c0_i32, %c0_i32_0 : i32, i32
  }
  func.func @transform_3(%arg0: i32) -> (i32, i32) {
    %c0_i32 = arith.constant 0 : i32
    %c0_i32_0 = arith.constant 0 : i32
    %c0_i32_1 = arith.constant 0 : i32
    return %c0_i32, %c0_i32_0 : i32, i32
  }
  func.func @transform_4(%arg0: i32) -> (i32, i32) {
    %c0_i32 = arith.constant 0 : i32
    %c0_i32_0 = arith.constant 0 : i32
    %c0_i32_1 = arith.constant 0 : i32
    return %c0_i32, %c0_i32_0 : i32, i32
  }
  func.func @transform_5(%arg0: i32) -> (i32, i32) {
    %c0_i32 = arith.constant 0 : i32
    %c0_i32_0 = arith.constant 0 : i32
    %c0_i32_1 = arith.constant 0 : i32
    return %c0_i32, %c0_i32_0 : i32, i32
  }
  func.func @transform_6(%arg0: i32) -> (i32, i32) {
    %c0_i32 = arith.constant 0 : i32
    %c0_i32_0 = arith.constant 0 : i32
    %c0_i32_1 = arith.constant 0 : i32
    return %c0_i32, %c0_i32_0 : i32, i32
  }
  func.func @transform_7(%arg0: i32) -> (i32, i32) {
    %c0_i32 = arith.constant 0 : i32
    %c0_i32_0 = arith.constant 0 : i32
    %c0_i32_1 = arith.constant 0 : i32
    return %c0_i32, %c0_i32_0 : i32, i32
  }
  func.func @transform_8(%arg0: i32) -> (i32, i32) {
    %c0_i32 = arith.constant 0 : i32
    %c0_i32_0 = arith.constant 0 : i32
    return %arg0, %c0_i32 : i32, i32
  }
  func.func @transform_9(%arg0: i32) -> (i32, i32) {
    %c0_i32 = arith.constant 0 : i32
    %c0_i32_0 = arith.constant 0 : i32
    return %arg0, %c0_i32 : i32, i32
  }
}

</mosaic_0001>

<llo_original>
// kernel: simclr_forward.1
$region0: #{simclr_forward.1}
  #allocation0 [shape = 'u32[]', space=smem, size = 0x4, offset = 0x4, fixed_abs, tag = 'smem constant byte address 0x4 - core index']
  #allocation1 [shape = 'u32[72,128]{1,0:T(1,128)}', space=vmem, size = 0x9000, scoped, tag = 'internal scratch']
  %s0 = inlined_call_operand.vmem [shape: bf16[4096,27], index: 0, kind: input, shape index: {}]
  %s1 = inlined_call_operand.vmem [shape: bf16[27,128], index: 1, kind: input, shape index: {}]
  %s2 = inlined_call_operand.vmem [shape: f32[1,128], index: 2, kind: input, shape index: {}]
  %s3 = inlined_call_operand.vmem [shape: bf16[8,2048], index: 3, kind: input, shape index: {}]
  %s4 = inlined_call_operand.vmem [shape: bf16[128,512], index: 4, kind: input, shape index: {}]
  %s5 = inlined_call_operand.vmem [shape: f32[1,512], index: 5, kind: input, shape index: {}]
  %s6 = inlined_call_operand.vmem [shape: bf16[512,128], index: 6, kind: input, shape index: {}]
  %s7 = inlined_call_operand.vmem [shape: f32[1,128], index: 7, kind: input, shape index: {}]
  %s8 = inlined_call_operand.hbm [shape: f32[16,128], index: 8, kind: output, shape index: {0}]
  %s9 = inlined_call_operand.hbm [shape: f32[16,128], index: 9, kind: output, shape index: {1}]
  %10 = xla_tuple %s8, %s9
  %s11 = sld [smem:[#allocation0]]
  $region73: #{simclr_forward.1} parent=0
    _
  %s13 = ssub.s32 1, %s11
  %s14 = scalar_select 0, %s13, %s11
  $region1: #{simclr_forward.1} parent=0
    #allocation2 [shape = 'u8[8192]{0}', space=vmem, size = 0x2000, scoped, tag = 'output window, operand 0']
    #allocation3 [shape = 's32[2]{0}', space=sflag, size = 0x8, scoped, tag = 'scoped memory for simclr_forward.1']
    #allocation4 [shape = 'u8[8192]{0}', space=vmem, size = 0x2000, scoped, tag = 'output window, operand 1']
    #allocation5 [shape = 's32[2]{0}', space=sflag, size = 0x8, scoped, tag = 'scoped memory for simclr_forward.1']
    %15 = vsyncpa [#allocation3], 0
    %s16 = scalar_lea.sflag [#allocation3], 1
    %17 = vsyncpa %s16, 0
    %18 = vsyncpa [#allocation5], 0
    %s19 = scalar_lea.sflag [#allocation5], 1
    %20 = vsyncpa %s19, 0
    loop: start=0, step=1, limit=4
    $region2: #{simclr_forward.1} parent=1 // loop_pre_header
      _
    $region3: #{simclr_forward.1} parent=1 // loop_header
      %s22 = sphi 0, %s26
      %p23 = scmp.ge.s32.totalorder %s22, 4
      %s32 = sphi 0, %s34
      %s35 = sphi 0, %s32
      %s36 = sphi 0, %s35
      %s52 = sphi 0, %s36
      %s56 = sphi 0, %s56
      %s58 = sphi 0, %s56
      %s59 = sphi 0, %s58
      %s73 = sphi 0, %s59
      %s77 = sphi 0, %s77
      %s79 = sphi 0, %s77
      %s80 = sphi 0, %s79
      %s94 = sphi 0, %s80
      %s98 = sphi 0, %s98
      %s100 = sphi 0, %s98
      %s101 = sphi 0, %s100
      %s115 = sphi 0, %s101
      %s119 = sphi 0, %s119
      %s121 = sphi 0, %s119
      %s122 = sphi 0, %s121
      %s136 = sphi 0, %s122
      %s140 = sphi 0, %s140
      %s142 = sphi 0, %s140
      %s143 = sphi 0, %s142
      %s157 = sphi 0, %s143
      %s161 = sphi 0, %s161
      %s163 = sphi 0, %s161
      %s164 = sphi 0, %s163
      %s178 = sphi 0, %s164
      %s182 = sphi 0, %s182
      %s184 = sphi 0, %s182
      %s185 = sphi 0, %s184
      %s199 = sphi 0, %s185
      %s205 = sphi 0, %s207
      %s208 = sphi 0, %s205
      %s209 = sphi 0, %s208
      %s225 = sphi 0, %s209
      %s231 = sphi 0, %s233
      %s234 = sphi 0, %s231
      %s235 = sphi 0, %s234
      %s251 = sphi 0, %s235
    $region4: #{simclr_forward.1} parent=1 // loop_header_branch
      %25 = sbr.rel (%p23) target = $region8
    $region5: #{simclr_forward.1} parent=1 // loop_body
      %s27 = ssub.s32 %s22, 1
      %s28 = ssub.s32 %s22, 2
      %s29 = sadd.s32 %s22, 1
      %s30 = ssub.s32 %s22, %s29
      %p31 = scmp.eq.s32.totalorder %s30, 0
      %s33 = sadd.s32 %s32, 1
      %s34 = scalar_select %p31, %s32, %s33
      %p37 = pneg %p31
      %p38 = scmp.eq.s32.totalorder %s22, 1
      %p39 = por %p37, %p38
      %p40 = scmp.ne.s32.totalorder %s32, %s35
      %p41 = scmp.eq.s32.totalorder %s22, 0
      %p42 = por %p40, %p41
      %p43 = scmp.ne.s32.totalorder %s32, %s35
      %p44 = scmp.eq.s32.totalorder %s27, 1
      %p45 = por %p43, %p44
      %p46 = scmp.ne.s32.totalorder %s35, %s36
      %p47 = scmp.eq.s32.totalorder %s27, 0
      %p48 = por %p46, %p47
      %p49 = scmp.ne.s32.totalorder %s35, %s36
      %p50 = scmp.eq.s32.totalorder %s28, 1
      %p51 = por %p49, %p50
      %p53 = scmp.ne.s32.totalorder %s36, %s52
      %p54 = scmp.eq.s32.totalorder %s28, 0
      %p55 = por %p53, %p54
      %s57 = sadd.s32 %s56, 1
      %p60 = scmp.eq.s32.totalorder %s22, 1
      %p61 = scmp.ne.s32.totalorder %s56, %s58
      %p62 = scmp.eq.s32.totalorder %s22, 0
      %p63 = por %p61, %p62
      %p64 = scmp.ne.s32.totalorder %s56, %s58
      %p65 = scmp.eq.s32.totalorder %s27, 1
      %p66 = por %p64, %p65
      %p67 = scmp.ne.s32.totalorder %s58, %s59
      %p68 = scmp.eq.s32.totalorder %s27, 0
      %p69 = por %p67, %p68
      %p70 = scmp.ne.s32.totalorder %s58, %s59
      %p71 = scmp.eq.s32.totalorder %s28, 1
      %p72 = por %p70, %p71
      %p74 = scmp.ne.s32.totalorder %s59, %s73
      %p75 = scmp.eq.s32.totalorder %s28, 0
      %p76 = por %p74, %p75
      %s78 = sadd.s32 %s77, 1
      %p81 = scmp.eq.s32.totalorder %s22, 1
      %p82 = scmp.ne.s32.totalorder %s77, %s79
      %p83 = scmp.eq.s32.totalorder %s22, 0
      %p84 = por %p82, %p83
      %p85 = scmp.ne.s32.totalorder %s77, %s79
      %p86 = scmp.eq.s32.totalorder %s27, 1
      %p87 = por %p85, %p86
      %p88 = scmp.ne.s32.totalorder %s79, %s80
      %p89 = scmp.eq.s32.totalorder %s27, 0
      %p90 = por %p88, %p89
      %p91 = scmp.ne.s32.totalorder %s79, %s80
      %p92 = scmp.eq.s32.totalorder %s28, 1
      %p93 = por %p91, %p92
      %p95 = scmp.ne.s32.totalorder %s80, %s94
      %p96 = scmp.eq.s32.totalorder %s28, 0
      %p97 = por %p95, %p96
      %s99 = sadd.s32 %s98, 1
      %p102 = scmp.eq.s32.totalorder %s22, 1
      %p103 = scmp.ne.s32.totalorder %s98, %s100
      %p104 = scmp.eq.s32.totalorder %s22, 0
      %p105 = por %p103, %p104
      %p106 = scmp.ne.s32.totalorder %s98, %s100
      %p107 = scmp.eq.s32.totalorder %s27, 1
      %p108 = por %p106, %p107
      %p109 = scmp.ne.s32.totalorder %s100, %s101
      %p110 = scmp.eq.s32.totalorder %s27, 0
      %p111 = por %p109, %p110
      %p112 = scmp.ne.s32.totalorder %s100, %s101
      %p113 = scmp.eq.s32.totalorder %s28, 1
      %p114 = por %p112, %p113
      %p116 = scmp.ne.s32.totalorder %s101, %s115
      %p117 = scmp.eq.s32.totalorder %s28, 0
      %p118 = por %p116, %p117
      %s120 = sadd.s32 %s119, 1
      %p123 = scmp.eq.s32.totalorder %s22, 1
      %p124 = scmp.ne.s32.totalorder %s119, %s121
      %p125 = scmp.eq.s32.totalorder %s22, 0
      %p126 = por %p124, %p125
      %p127 = scmp.ne.s32.totalorder %s119, %s121
      %p128 = scmp.eq.s32.totalorder %s27, 1
      %p129 = por %p127, %p128
      %p130 = scmp.ne.s32.totalorder %s121, %s122
      %p131 = scmp.eq.s32.totalorder %s27, 0
      %p132 = por %p130, %p131
      %p133 = scmp.ne.s32.totalorder %s121, %s122
      %p134 = scmp.eq.s32.totalorder %s28, 1
      %p135 = por %p133, %p134
      %p137 = scmp.ne.s32.totalorder %s122, %s136
      %p138 = scmp.eq.s32.totalorder %s28, 0
      %p139 = por %p137, %p138
      %s141 = sadd.s32 %s140, 1
      %p144 = scmp.eq.s32.totalorder %s22, 1
      %p145 = scmp.ne.s32.totalorder %s140, %s142
      %p146 = scmp.eq.s32.totalorder %s22, 0
      %p147 = por %p145, %p146
      %p148 = scmp.ne.s32.totalorder %s140, %s142
      %p149 = scmp.eq.s32.totalorder %s27, 1
      %p150 = por %p148, %p149
      %p151 = scmp.ne.s32.totalorder %s142, %s143
      %p152 = scmp.eq.s32.totalorder %s27, 0
      %p153 = por %p151, %p152
      %p154 = scmp.ne.s32.totalorder %s142, %s143
      %p155 = scmp.eq.s32.totalorder %s28, 1
      %p156 = por %p154, %p155
      %p158 = scmp.ne.s32.totalorder %s143, %s157
      %p159 = scmp.eq.s32.totalorder %s28, 0
      %p160 = por %p158, %p159
      %s162 = sadd.s32 %s161, 1
      %p165 = scmp.eq.s32.totalorder %s22, 1
      %p166 = scmp.ne.s32.totalorder %s161, %s163
      %p167 = scmp.eq.s32.totalorder %s22, 0
      %p168 = por %p166, %p167
      %p169 = scmp.ne.s32.totalorder %s161, %s163
      %p170 = scmp.eq.s32.totalorder %s27, 1
      %p171 = por %p169, %p170
      %p172 = scmp.ne.s32.totalorder %s163, %s164
      %p173 = scmp.eq.s32.totalorder %s27, 0
      %p174 = por %p172, %p173
      %p175 = scmp.ne.s32.totalorder %s163, %s164
      %p176 = scmp.eq.s32.totalorder %s28, 1
      %p177 = por %p175, %p176
      %p179 = scmp.ne.s32.totalorder %s164, %s178
      %p180 = scmp.eq.s32.totalorder %s28, 0
      %p181 = por %p179, %p180
      %s183 = sadd.s32 %s182, 1
      %p186 = scmp.eq.s32.totalorder %s22, 1
      %p187 = scmp.ne.s32.totalorder %s182, %s184
      %p188 = scmp.eq.s32.totalorder %s22, 0
      %p189 = por %p187, %p188
      %p190 = scmp.ne.s32.totalorder %s182, %s184
      %p191 = scmp.eq.s32.totalorder %s27, 1
      %p192 = por %p190, %p191
      %p193 = scmp.ne.s32.totalorder %s184, %s185
      %p194 = scmp.eq.s32.totalorder %s27, 0
      %p195 = por %p193, %p194
      %p196 = scmp.ne.s32.totalorder %s184, %s185
      %p197 = scmp.eq.s32.totalorder %s28, 1
      %p198 = por %p196, %p197
      %p200 = scmp.ne.s32.totalorder %s185, %s199
      %p201 = scmp.eq.s32.totalorder %s28, 0
      %p202 = por %p200, %p201
      %s203 = ssub.s32 %s22, %s29
      %p204 = scmp.eq.s32.totalorder %s203, 0
      %s206 = sadd.s32 %s205, 1
      %s207 = scalar_select %p204, %s205, %s206
      %p210 = pneg %p204
      %p211 = scmp.eq.s32.totalorder %s22, 1
      %p212 = por %p210, %p211
      %p213 = scmp.ne.s32.totalorder %s205, %s208
      %p214 = scmp.eq.s32.totalorder %s22, 0
      %p215 = por %p213, %p214
      %p216 = scmp.ne.s32.totalorder %s205, %s208
      %p217 = scmp.eq.s32.totalorder %s27, 1
      %p218 = por %p216, %p217
      %p219 = scmp.ne.s32.totalorder %s208, %s209
      %p220 = scmp.eq.s32.totalorder %s27, 0
      %p221 = por %p219, %p220
      %p222 = scmp.ne.s32.totalorder %s208, %s209
      %p223 = scmp.eq.s32.totalorder %s28, 1
      %p224 = por %p222, %p223
      %p226 = scmp.ne.s32.totalorder %s209, %s225
      %p227 = scmp.eq.s32.totalorder %s28, 0
      %p228 = por %p226, %p227
      %s229 = ssub.s32 %s22, %s29
      %p230 = scmp.eq.s32.totalorder %s229, 0
      %s232 = sadd.s32 %s231, 1
      %s233 = scalar_select %p230, %s231, %s232
      %p236 = pneg %p230
      %p237 = scmp.eq.s32.totalorder %s22, 1
      %p238 = por %p236, %p237
      %p239 = scmp.ne.s32.totalorder %s231, %s234
      %p240 = scmp.eq.s32.totalorder %s22, 0
      %p241 = por %p239, %p240
      %p242 = scmp.ne.s32.totalorder %s231, %s234
      %p243 = scmp.eq.s32.totalorder %s27, 1
      %p244 = por %p242, %p243
      %p245 = scmp.ne.s32.totalorder %s234, %s235
      %p246 = scmp.eq.s32.totalorder %s27, 0
      %p247 = por %p245, %p246
      %p248 = scmp.ne.s32.totalorder %s234, %s235
      %p249 = scmp.eq.s32.totalorder %s28, 1
      %p250 = por %p248, %p249
      %p252 = scmp.ne.s32.totalorder %s235, %s251
      %p253 = scmp.eq.s32.totalorder %s28, 0
      %p254 = por %p252, %p253
      %p255 = scmp.le.s32.totalorder 1, %s22
      %p256 = scmp.lt.s32.totalorder %s22, 3
      %p257 = pnand %p255, %p256
      %p258 = pneg %p257
      // Predicated region
      $region9: #{simclr_forward.1} parent=5 // pred_check
        _
      $region10: #{simclr_forward.1} parent=5 // pred_check_branch
        %260 = sbr.rel (%p257) target = $region12
      $region11: #{simclr_forward.1} parent=5 // pred_region
        %s261 = ssub.s32 %s22, 1
        // Predicated region
        $region13: #{simclr_forward.1} parent=11 // pred_check
          %p262 = pneg %p69
        $region14: #{simclr_forward.1} parent=11 // pred_check_branch
          %264 = sbr.rel (%p262) target = $region16
        $region15: #{simclr_forward.1} parent=11 // pred_region
          _
        $region16: #{simclr_forward.1} parent=11 // pred_fallthru
          _
        // Predicated region
        $region17: #{simclr_forward.1} parent=11 // pred_check
          %p265 = pneg %p90
        $region18: #{simclr_forward.1} parent=11 // pred_check_branch
          %267 = sbr.rel (%p265) target = $region20
        $region19: #{simclr_forward.1} parent=11 // pred_region
          _
        $region20: #{simclr_forward.1} parent=11 // pred_fallthru
          _
        // Predicated region
        $region21: #{simclr_forward.1} parent=11 // pred_check
          %p268 = pneg %p111
        $region22: #{simclr_forward.1} parent=11 // pred_check_branch
          %270 = sbr.rel (%p268) target = $region24
        $region23: #{simclr_forward.1} parent=11 // pred_region
          _
        $region24: #{simclr_forward.1} parent=11 // pred_fallthru
          _
        // Predicated region
        $region25: #{simclr_forward.1} parent=11 // pred_check
          %p271 = pneg %p132
        $region26: #{simclr_forward.1} parent=11 // pred_check_branch
          %273 = sbr.rel (%p271) target = $region28
        $region27: #{simclr_forward.1} parent=11 // pred_region
          _
        $region28: #{simclr_forward.1} parent=11 // pred_fallthru
          _
        // Predicated region
        $region29: #{simclr_forward.1} parent=11 // pred_check
          %p274 = pneg %p153
        $region30: #{simclr_forward.1} parent=11 // pred_check_branch
          %276 = sbr.rel (%p274) target = $region32
        $region31: #{simclr_forward.1} parent=11 // pred_region
          _
        $region32: #{simclr_forward.1} parent=11 // pred_fallthru
          _
        // Predicated region
        $region33: #{simclr_forward.1} parent=11 // pred_check
          %p277 = pneg %p174
        $region34: #{simclr_forward.1} parent=11 // pred_check_branch
          %279 = sbr.rel (%p277) target = $region36
        $region35: #{simclr_forward.1} parent=11 // pred_region
          _
        $region36: #{simclr_forward.1} parent=11 // pred_fallthru
          _
        // Predicated region
        $region37: #{simclr_forward.1} parent=11 // pred_check
          %p280 = pneg %p195
        $region38: #{simclr_forward.1} parent=11 // pred_check_branch
          %282 = sbr.rel (%p280) target = $region40
        $region39: #{simclr_forward.1} parent=11 // pred_region
          _
        $region40: #{simclr_forward.1} parent=11 // pred_fallthru
          _
      $region12: #{simclr_forward.1} parent=5 // pred_fallthru
        _
      %p283 = scmp.lt.s32.totalorder %s22, 2
      // Predicated region
      $region41: #{simclr_forward.1} parent=5 // pred_check
        %p284 = pneg %p283
      $region42: #{simclr_forward.1} parent=5 // pred_check_branch
        %286 = sbr.rel (%p284) target = $region44
      $region43: #{simclr_forward.1} parent=5 // pred_region
        // Predicated region
        $region45: #{simclr_forward.1} parent=43 // pred_check
          %p287 = pneg %p42
        $region46: #{simclr_forward.1} parent=43 // pred_check_branch
          %289 = sbr.rel (%p287) target = $region48
        $region47: #{simclr_forward.1} parent=43 // pred_region
          %s290 = smul.u32 256, %s22
          %p291 = scmp.lt.s32.totalorder %s290, 511
          %s292 = scalar_select %p291, %s290, 511
          %s293 = smul.addr %s292, 4
          %s294 = scalar_lea.vmem %s0, %s293
          %s295 = smul.u32 256, %s22
        $region48: #{simclr_forward.1} parent=43 // pred_fallthru
          _
      $region44: #{simclr_forward.1} parent=5 // pred_fallthru
        _
      %p296 = scmp.le.s32.totalorder 1, %s22
      %p297 = scmp.lt.s32.totalorder %s22, 3
      %p298 = pnand %p296, %p297
      %p299 = pneg %p298
      // Predicated region
      $region49: #{simclr_forward.1} parent=5 // pred_check
        _
      $region50: #{simclr_forward.1} parent=5 // pred_check_branch
        %301 = sbr.rel (%p298) target = $region52
      $region51: #{simclr_forward.1} parent=5 // pred_region
        %s302 = ssub.s32 %s22, 1
        %s303 = smul.u32 256, %s27
        %p304 = scmp.lt.s32.totalorder %s303, 511
        %s305 = scalar_select %p304, %s303, 511
        %s306 = smul.addr %s305, 4
        %s307 = scalar_lea.vmem %s0, %s306
        %p308 = pneg %p48
        %p309 = pneg %p45
        %p310 = pneg %p69
        %p311 = pneg %p66
        %p312 = pneg %p90
        %p313 = pneg %p87
        %p314 = pneg %p111
        %p315 = pneg %p108
        %p316 = pneg %p132
        %p317 = pneg %p129
        %p318 = pneg %p153
        %p319 = pneg %p150
        %p320 = pneg %p174
        %p321 = pneg %p171
        %p322 = pneg %p195
        %p323 = pneg %p192
        %p324 = pneg %p221
        %p325 = pneg %p218
        %s326 = sand.u32 %s208, 1
        %s327 = scalar_lea.sflag [#allocation3], %s326
        %s328 = sand.u32 %s208, 1
        %s329 = smul.addr %s328, 8
        %s330 = scalar_lea.vmem [#allocation2], %s329
        %p331 = pneg %p247
        %p332 = pneg %p244
        %s333 = sand.u32 %s234, 1
        %s334 = scalar_lea.sflag [#allocation5], %s333
        %s335 = sand.u32 %s234, 1
        %s336 = smul.addr %s335, 8
        %s337 = scalar_lea.vmem [#allocation4], %s336
        %s338 = smul.u32 256, %s27
        %p339 = scmp.lt.s32.totalorder %s338, 511
        %s340 = scalar_select %p339, %s338, 511
        %s341 = smul.addr %s340, 4
        %s342 = scalar_lea.vmem %s0, %s341
        %s343 = smul.u32 256, %s27
        %v345 = vld [vmem:[%s342] sm:$0xf]
        %v346 = vld [vmem:[%s342 + $0x4] sm:$0xf]
        %v347 = vld [vmem:[%s342 + $0x8] sm:$0xf]
        %v348 = vld [vmem:[%s342 + $0xc] sm:$0xf]
        %v349 = vld [vmem:[%s342 + $0x10] sm:$0xf]
        %v350 = vld [vmem:[%s342 + $0x14] sm:$0xf]
        %v351 = vld [vmem:[%s342 + $0x18] sm:$0xf]
        %v352 = vld [vmem:[%s342 + $0x1c] sm:$0xf]
        %v353 = vld [vmem:[%s342 + $0x20] sm:$0xf]
        %v354 = vld [vmem:[%s342 + $0x24] sm:$0xf]
        %v355 = vld [vmem:[%s342 + $0x28] sm:$0xf]
        %v356 = vld [vmem:[%s342 + $0x2c] sm:$0xf]
        %v357 = vld [vmem:[%s342 + $0x30] sm:$0xf]
        %v358 = vld [vmem:[%s342 + $0x34] sm:$0xf]
        %v359 = vld [vmem:[%s342 + $0x38] sm:$0xf]
        %v360 = vld [vmem:[%s342 + $0x3c] sm:$0xf]
        %v361 = vld [vmem:[%s342 + $0x40] sm:$0xf]
        %v362 = vld [vmem:[%s342 + $0x44] sm:$0xf]
        %v363 = vld [vmem:[%s342 + $0x48] sm:$0xf]
        %v364 = vld [vmem:[%s342 + $0x4c] sm:$0xf]
        %v365 = vld [vmem:[%s342 + $0x50] sm:$0xf]
        %v366 = vld [vmem:[%s342 + $0x54] sm:$0xf]
        %v367 = vld [vmem:[%s342 + $0x58] sm:$0xf]
        %v368 = vld [vmem:[%s342 + $0x5c] sm:$0xf]
        %v369 = vld [vmem:[%s342 + $0x60] sm:$0xf]
        %v370 = vld [vmem:[%s342 + $0x64] sm:$0xf]
        %v371 = vld [vmem:[%s342 + $0x68] sm:$0xf]
        %v372 = vld [vmem:[%s342 + $0x6c] sm:$0xf]
        %v373 = vld [vmem:[%s342 + $0x70] sm:$0xf]
        %v374 = vld [vmem:[%s342 + $0x74] sm:$0xf]
        %v375 = vld [vmem:[%s342 + $0x78] sm:$0xf]
        %v376 = vld [vmem:[%s342 + $0x7c] sm:$0xf]
        %v377 = vld [vmem:[%s342 + $0x80] sm:$0xf]
        %v378 = vld [vmem:[%s342 + $0x84] sm:$0xf]
        %v379 = vld [vmem:[%s342 + $0x88] sm:$0xf]
        %v380 = vld [vmem:[%s342 + $0x8c] sm:$0xf]
        %v381 = vld [vmem:[%s342 + $0x90] sm:$0xf]
        %v382 = vld [vmem:[%s342 + $0x94] sm:$0xf]
        %v383 = vld [vmem:[%s342 + $0x98] sm:$0xf]
        %v384 = vld [vmem:[%s342 + $0x9c] sm:$0xf]
        %v385 = vld [vmem:[%s342 + $0xa0] sm:$0xf]
        %v386 = vld [vmem:[%s342 + $0xa4] sm:$0xf]
        %v387 = vld [vmem:[%s342 + $0xa8] sm:$0xf]
        %v388 = vld [vmem:[%s342 + $0xac] sm:$0xf]
        %v389 = vld [vmem:[%s342 + $0xb0] sm:$0xf]
        %v390 = vld [vmem:[%s342 + $0xb4] sm:$0xf]
        %v391 = vld [vmem:[%s342 + $0xb8] sm:$0xf]
        %v392 = vld [vmem:[%s342 + $0xbc] sm:$0xf]
        %v393 = vld [vmem:[%s342 + $0xc0] sm:$0xf]
        %v394 = vld [vmem:[%s342 + $0xc4] sm:$0xf]
        %v395 = vld [vmem:[%s342 + $0xc8] sm:$0xf]
        %v396 = vld [vmem:[%s342 + $0xcc] sm:$0xf]
        %v397 = vld [vmem:[%s342 + $0xd0] sm:$0xf]
        %v398 = vld [vmem:[%s342 + $0xd4] sm:$0xf]
        %v399 = vld [vmem:[%s342 + $0xd8] sm:$0xf]
        %v400 = vld [vmem:[%s342 + $0xdc] sm:$0xf]
        %v401 = vld [vmem:[%s342 + $0xe0] sm:$0xf]
        %v402 = vld [vmem:[%s342 + $0xe4] sm:$0xf]
        %v403 = vld [vmem:[%s342 + $0xe8] sm:$0xf]
        %v404 = vld [vmem:[%s342 + $0xec] sm:$0xf]
        %v405 = vld [vmem:[%s342 + $0xf0] sm:$0xf]
        %v406 = vld [vmem:[%s342 + $0xf4] sm:$0xf]
        %v407 = vld [vmem:[%s342 + $0xf8] sm:$0xf]
        %v408 = vld [vmem:[%s342 + $0xfc] sm:$0xf]
        %v409 = vld [vmem:[%s342 + $0x100] sm:$0xf]
        %v410 = vld [vmem:[%s342 + $0x104] sm:$0xf]
        %v411 = vld [vmem:[%s342 + $0x108] sm:$0xf]
        %v412 = vld [vmem:[%s342 + $0x10c] sm:$0xf]
        %v413 = vld [vmem:[%s342 + $0x110] sm:$0xf]
        %v414 = vld [vmem:[%s342 + $0x114] sm:$0xf]
        %v415 = vld [vmem:[%s342 + $0x118] sm:$0xf]
        %v416 = vld [vmem:[%s342 + $0x11c] sm:$0xf]
        %v417 = vld [vmem:[%s342 + $0x120] sm:$0xf]
        %v418 = vld [vmem:[%s342 + $0x124] sm:$0xf]
        %v419 = vld [vmem:[%s342 + $0x128] sm:$0xf]
        %v420 = vld [vmem:[%s342 + $0x12c] sm:$0xf]
        %v421 = vld [vmem:[%s342 + $0x130] sm:$0xf]
        %v422 = vld [vmem:[%s342 + $0x134] sm:$0xf]
        %v423 = vld [vmem:[%s342 + $0x138] sm:$0xf]
        %v424 = vld [vmem:[%s342 + $0x13c] sm:$0xf]
        %v425 = vld [vmem:[%s342 + $0x140] sm:$0xf]
        %v426 = vld [vmem:[%s342 + $0x144] sm:$0xf]
        %v427 = vld [vmem:[%s342 + $0x148] sm:$0xf]
        %v428 = vld [vmem:[%s342 + $0x14c] sm:$0xf]
        %v429 = vld [vmem:[%s342 + $0x150] sm:$0xf]
        %v430 = vld [vmem:[%s342 + $0x154] sm:$0xf]
        %v431 = vld [vmem:[%s342 + $0x158] sm:$0xf]
        %v432 = vld [vmem:[%s342 + $0x15c] sm:$0xf]
        %v433 = vld [vmem:[%s342 + $0x160] sm:$0xf]
        %v434 = vld [vmem:[%s342 + $0x164] sm:$0xf]
        %v435 = vld [vmem:[%s342 + $0x168] sm:$0xf]
        %v436 = vld [vmem:[%s342 + $0x16c] sm:$0xf]
        %v437 = vld [vmem:[%s342 + $0x170] sm:$0xf]
        %v438 = vld [vmem:[%s342 + $0x174] sm:$0xf]
        %v439 = vld [vmem:[%s342 + $0x178] sm:$0xf]
        %v440 = vld [vmem:[%s342 + $0x17c] sm:$0xf]
        %v441 = vld [vmem:[%s342 + $0x180] sm:$0xf]
        %v442 = vld [vmem:[%s342 + $0x184] sm:$0xf]
        %v443 = vld [vmem:[%s342 + $0x188] sm:$0xf]
        %v444 = vld [vmem:[%s342 + $0x18c] sm:$0xf]
        %v445 = vld [vmem:[%s342 + $0x190] sm:$0xf]
        %v446 = vld [vmem:[%s342 + $0x194] sm:$0xf]
        %v447 = vld [vmem:[%s342 + $0x198] sm:$0xf]
        %v448 = vld [vmem:[%s342 + $0x19c] sm:$0xf]
        %v449 = vld [vmem:[%s342 + $0x1a0] sm:$0xf]
        %v450 = vld [vmem:[%s342 + $0x1a4] sm:$0xf]
        %v451 = vld [vmem:[%s342 + $0x1a8] sm:$0xf]
        %v452 = vld [vmem:[%s342 + $0x1ac] sm:$0xf]
        %v453 = vld [vmem:[%s342 + $0x1b0] sm:$0xf]
        %v454 = vld [vmem:[%s342 + $0x1b4] sm:$0xf]
        %v455 = vld [vmem:[%s342 + $0x1b8] sm:$0xf]
        %v456 = vld [vmem:[%s342 + $0x1bc] sm:$0xf]
        %v457 = vld [vmem:[%s342 + $0x1c0] sm:$0xf]
        %v458 = vld [vmem:[%s342 + $0x1c4] sm:$0xf]
        %v459 = vld [vmem:[%s342 + $0x1c8] sm:$0xf]
        %v460 = vld [vmem:[%s342 + $0x1cc] sm:$0xf]
        %v461 = vld [vmem:[%s342 + $0x1d0] sm:$0xf]
        %v462 = vld [vmem:[%s342 + $0x1d4] sm:$0xf]
        %v463 = vld [vmem:[%s342 + $0x1d8] sm:$0xf]
        %v464 = vld [vmem:[%s342 + $0x1dc] sm:$0xf]
        %v465 = vld [vmem:[%s342 + $0x1e0] sm:$0xf]
        %v466 = vld [vmem:[%s342 + $0x1e4] sm:$0xf]
        %v467 = vld [vmem:[%s342 + $0x1e8] sm:$0xf]
        %v468 = vld [vmem:[%s342 + $0x1ec] sm:$0xf]
        %v469 = vld [vmem:[%s342 + $0x1f0] sm:$0xf]
        %v470 = vld [vmem:[%s342 + $0x1f4] sm:$0xf]
        %v471 = vld [vmem:[%s342 + $0x1f8] sm:$0xf]
        %v472 = vld [vmem:[%s342 + $0x1fc] sm:$0xf]
        %v473 = vld [vmem:[%s342 + $0x200] sm:$0xf]
        %v474 = vld [vmem:[%s342 + $0x204] sm:$0xf]
        %v475 = vld [vmem:[%s342 + $0x208] sm:$0xf]
        %v476 = vld [vmem:[%s342 + $0x20c] sm:$0xf]
        %v477 = vld [vmem:[%s342 + $0x210] sm:$0xf]
        %v478 = vld [vmem:[%s342 + $0x214] sm:$0xf]
        %v479 = vld [vmem:[%s342 + $0x218] sm:$0xf]
        %v480 = vld [vmem:[%s342 + $0x21c] sm:$0xf]
        %v481 = vld [vmem:[%s342 + $0x220] sm:$0xf]
        %v482 = vld [vmem:[%s342 + $0x224] sm:$0xf]
        %v483 = vld [vmem:[%s342 + $0x228] sm:$0xf]
        %v484 = vld [vmem:[%s342 + $0x22c] sm:$0xf]
        %v485 = vld [vmem:[%s342 + $0x230] sm:$0xf]
        %v486 = vld [vmem:[%s342 + $0x234] sm:$0xf]
        %v487 = vld [vmem:[%s342 + $0x238] sm:$0xf]
        %v488 = vld [vmem:[%s342 + $0x23c] sm:$0xf]
        %v489 = vld [vmem:[%s342 + $0x240] sm:$0xf]
        %v490 = vld [vmem:[%s342 + $0x244] sm:$0xf]
        %v491 = vld [vmem:[%s342 + $0x248] sm:$0xf]
        %v492 = vld [vmem:[%s342 + $0x24c] sm:$0xf]
        %v493 = vld [vmem:[%s342 + $0x250] sm:$0xf]
        %v494 = vld [vmem:[%s342 + $0x254] sm:$0xf]
        %v495 = vld [vmem:[%s342 + $0x258] sm:$0xf]
        %v496 = vld [vmem:[%s342 + $0x25c] sm:$0xf]
        %v497 = vld [vmem:[%s342 + $0x260] sm:$0xf]
        %v498 = vld [vmem:[%s342 + $0x264] sm:$0xf]
        %v499 = vld [vmem:[%s342 + $0x268] sm:$0xf]
        %v500 = vld [vmem:[%s342 + $0x26c] sm:$0xf]
        %v501 = vld [vmem:[%s342 + $0x270] sm:$0xf]
        %v502 = vld [vmem:[%s342 + $0x274] sm:$0xf]
        %v503 = vld [vmem:[%s342 + $0x278] sm:$0xf]
        %v504 = vld [vmem:[%s342 + $0x27c] sm:$0xf]
        %v505 = vld [vmem:[%s342 + $0x280] sm:$0xf]
        %v506 = vld [vmem:[%s342 + $0x284] sm:$0xf]
        %v507 = vld [vmem:[%s342 + $0x288] sm:$0xf]
        %v508 = vld [vmem:[%s342 + $0x28c] sm:$0xf]
        %v509 = vld [vmem:[%s342 + $0x290] sm:$0xf]
        %v510 = vld [vmem:[%s342 + $0x294] sm:$0xf]
        %v511 = vld [vmem:[%s342 + $0x298] sm:$0xf]
        %v512 = vld [vmem:[%s342 + $0x29c] sm:$0xf]
        %v513 = vld [vmem:[%s342 + $0x2a0] sm:$0xf]
        %v514 = vld [vmem:[%s342 + $0x2a4] sm:$0xf]
        %v515 = vld [vmem:[%s342 + $0x2a8] sm:$0xf]
        %v516 = vld [vmem:[%s342 + $0x2ac] sm:$0xf]
        %v517 = vld [vmem:[%s342 + $0x2b0] sm:$0xf]
        %v518 = vld [vmem:[%s342 + $0x2b4] sm:$0xf]
        %v519 = vld [vmem:[%s342 + $0x2b8] sm:$0xf]
        %v520 = vld [vmem:[%s342 + $0x2bc] sm:$0xf]
        %v521 = vld [vmem:[%s342 + $0x2c0] sm:$0xf]
        %v522 = vld [vmem:[%s342 + $0x2c4] sm:$0xf]
        %v523 = vld [vmem:[%s342 + $0x2c8] sm:$0xf]
        %v524 = vld [vmem:[%s342 + $0x2cc] sm:$0xf]
        %v525 = vld [vmem:[%s342 + $0x2d0] sm:$0xf]
        %v526 = vld [vmem:[%s342 + $0x2d4] sm:$0xf]
        %v527 = vld [vmem:[%s342 + $0x2d8] sm:$0xf]
        %v528 = vld [vmem:[%s342 + $0x2dc] sm:$0xf]
        %v529 = vld [vmem:[%s342 + $0x2e0] sm:$0xf]
        %v530 = vld [vmem:[%s342 + $0x2e4] sm:$0xf]
        %v531 = vld [vmem:[%s342 + $0x2e8] sm:$0xf]
        %v532 = vld [vmem:[%s342 + $0x2ec] sm:$0xf]
        %v533 = vld [vmem:[%s342 + $0x2f0] sm:$0xf]
        %v534 = vld [vmem:[%s342 + $0x2f4] sm:$0xf]
        %v535 = vld [vmem:[%s342 + $0x2f8] sm:$0xf]
        %v536 = vld [vmem:[%s342 + $0x2fc] sm:$0xf]
        %v537 = vld [vmem:[%s342 + $0x300] sm:$0xf]
        %v538 = vld [vmem:[%s342 + $0x304] sm:$0xf]
        %v539 = vld [vmem:[%s342 + $0x308] sm:$0xf]
        %v540 = vld [vmem:[%s342 + $0x30c] sm:$0xf]
        %v541 = vld [vmem:[%s342 + $0x310] sm:$0xf]
        %v542 = vld [vmem:[%s342 + $0x314] sm:$0xf]
        %v543 = vld [vmem:[%s342 + $0x318] sm:$0xf]
        %v544 = vld [vmem:[%s342 + $0x31c] sm:$0xf]
        %v545 = vld [vmem:[%s342 + $0x320] sm:$0xf]
        %v546 = vld [vmem:[%s342 + $0x324] sm:$0xf]
        %v547 = vld [vmem:[%s342 + $0x328] sm:$0xf]
        %v548 = vld [vmem:[%s342 + $0x32c] sm:$0xf]
        %v549 = vld [vmem:[%s342 + $0x330] sm:$0xf]
        %v550 = vld [vmem:[%s342 + $0x334] sm:$0xf]
        %v551 = vld [vmem:[%s342 + $0x338] sm:$0xf]
        %v552 = vld [vmem:[%s342 + $0x33c] sm:$0xf]
        %v553 = vld [vmem:[%s342 + $0x340] sm:$0xf]
        %v554 = vld [vmem:[%s342 + $0x344] sm:$0xf]
        %v555 = vld [vmem:[%s342 + $0x348] sm:$0xf]
        %v556 = vld [vmem:[%s342 + $0x34c] sm:$0xf]
        %v557 = vld [vmem:[%s342 + $0x350] sm:$0xf]
        %v558 = vld [vmem:[%s342 + $0x354] sm:$0xf]
        %v559 = vld [vmem:[%s342 + $0x358] sm:$0xf]
        %v560 = vld [vmem:[%s342 + $0x35c] sm:$0xf]
        %v561 = vld [vmem:[%s342 + $0x360] sm:$0xf]
        %v562 = vld [vmem:[%s342 + $0x364] sm:$0xf]
        %v563 = vld [vmem:[%s342 + $0x368] sm:$0xf]
        %v564 = vld [vmem:[%s342 + $0x36c] sm:$0xf]
        %v565 = vld [vmem:[%s342 + $0x370] sm:$0xf]
        %v566 = vld [vmem:[%s342 + $0x374] sm:$0xf]
        %v567 = vld [vmem:[%s342 + $0x378] sm:$0xf]
        %v568 = vld [vmem:[%s342 + $0x37c] sm:$0xf]
        %v569 = vld [vmem:[%s342 + $0x380] sm:$0xf]
        %v570 = vld [vmem:[%s342 + $0x384] sm:$0xf]
        %v571 = vld [vmem:[%s342 + $0x388] sm:$0xf]
        %v572 = vld [vmem:[%s342 + $0x38c] sm:$0xf]
        %v573 = vld [vmem:[%s342 + $0x390] sm:$0xf]
        %v574 = vld [vmem:[%s342 + $0x394] sm:$0xf]
        %v575 = vld [vmem:[%s342 + $0x398] sm:$0xf]
        %v576 = vld [vmem:[%s342 + $0x39c] sm:$0xf]
        %v577 = vld [vmem:[%s342 + $0x3a0] sm:$0xf]
        %v578 = vld [vmem:[%s342 + $0x3a4] sm:$0xf]
        %v579 = vld [vmem:[%s342 + $0x3a8] sm:$0xf]
        %v580 = vld [vmem:[%s342 + $0x3ac] sm:$0xf]
        %v581 = vld [vmem:[%s342 + $0x3b0] sm:$0xf]
        %v582 = vld [vmem:[%s342 + $0x3b4] sm:$0xf]
        %v583 = vld [vmem:[%s342 + $0x3b8] sm:$0xf]
        %v584 = vld [vmem:[%s342 + $0x3bc] sm:$0xf]
        %v585 = vld [vmem:[%s342 + $0x3c0] sm:$0xf]
        %v586 = vld [vmem:[%s342 + $0x3c4] sm:$0xf]
        %v587 = vld [vmem:[%s342 + $0x3c8] sm:$0xf]
        %v588 = vld [vmem:[%s342 + $0x3cc] sm:$0xf]
        %v589 = vld [vmem:[%s342 + $0x3d0] sm:$0xf]
        %v590 = vld [vmem:[%s342 + $0x3d4] sm:$0xf]
        %v591 = vld [vmem:[%s342 + $0x3d8] sm:$0xf]
        %v592 = vld [vmem:[%s342 + $0x3dc] sm:$0xf]
        %v593 = vld [vmem:[%s342 + $0x3e0] sm:$0xf]
        %v594 = vld [vmem:[%s342 + $0x3e4] sm:$0xf]
        %v595 = vld [vmem:[%s342 + $0x3e8] sm:$0xf]
        %v596 = vld [vmem:[%s342 + $0x3ec] sm:$0xf]
        %v597 = vld [vmem:[%s342 + $0x3f0] sm:$0xf]
        %v598 = vld [vmem:[%s342 + $0x3f4] sm:$0xf]
        %v599 = vld [vmem:[%s342 + $0x3f8] sm:$0xf]
        %v600 = vld [vmem:[%s342 + $0x3fc] sm:$0xf]
        %v601 = vld [vmem:[%s1] sm:$0xf]
        %v602 = vld [vmem:[%s1 + $0x4] sm:$0xf]
        %v603 = vld [vmem:[%s1 + $0x8] sm:$0xf]
        %v604 = vld [vmem:[%s1 + $0xc] sm:$0x3]
        %v605 = vld [vmem:[%s2] sm:$0x1]
        %v607 = vperm.slane %v605, 0
        %v865 = vunpack.c.l.b16 %v345
        %v866 = vunpack.c.l.b16 %v346
        %v867 = vunpack.c.l.b16 %v347
        %v868 = vunpack.c.l.b16 %v348
        %v869 = vunpack.c.l.b16 %v349
        %v870 = vunpack.c.l.b16 %v350
        %v871 = vunpack.c.l.b16 %v351
        %v872 = vunpack.c.l.b16 %v352
        %v873 = vunpack.c.l.b16 %v353
        %v874 = vunpack.c.l.b16 %v354
        %v875 = vunpack.c.l.b16 %v355
        %v876 = vunpack.c.l.b16 %v356
        %v877 = vunpack.c.l.b16 %v357
        %v878 = vunpack.c.l.b16 %v358
        %v879 = vunpack.c.l.b16 %v359
        %v880 = vunpack.c.l.b16 %v360
        %v881 = vunpack.c.l.b16 %v361
        %v882 = vunpack.c.l.b16 %v362
        %v883 = vunpack.c.l.b16 %v363
        %v884 = vunpack.c.l.b16 %v364
        %v885 = vunpack.c.l.b16 %v365
        %v886 = vunpack.c.l.b16 %v366
        %v887 = vunpack.c.l.b16 %v367
        %v888 = vunpack.c.l.b16 %v368
        %v889 = vunpack.c.l.b16 %v369
        %v890 = vunpack.c.l.b16 %v370
        %v891 = vunpack.c.l.b16 %v371
        %v892 = vunpack.c.l.b16 %v372
        %v893 = vunpack.c.l.b16 %v373
        %v894 = vunpack.c.l.b16 %v374
        %v895 = vunpack.c.l.b16 %v375
        %v896 = vunpack.c.l.b16 %v376
        %v897 = vunpack.c.l.b16 %v377
        %v898 = vunpack.c.l.b16 %v378
        %v899 = vunpack.c.l.b16 %v379
        %v900 = vunpack.c.l.b16 %v380
        %v901 = vunpack.c.l.b16 %v381
        %v902 = vunpack.c.l.b16 %v382
        %v903 = vunpack.c.l.b16 %v383
        %v904 = vunpack.c.l.b16 %v384
        %v905 = vunpack.c.l.b16 %v385
        %v906 = vunpack.c.l.b16 %v386
        %v907 = vunpack.c.l.b16 %v387
        %v908 = vunpack.c.l.b16 %v388
        %v909 = vunpack.c.l.b16 %v389
        %v910 = vunpack.c.l.b16 %v390
        %v911 = vunpack.c.l.b16 %v391
        %v912 = vunpack.c.l.b16 %v392
        %v913 = vunpack.c.l.b16 %v393
        %v914 = vunpack.c.l.b16 %v394
        %v915 = vunpack.c.l.b16 %v395
        %v916 = vunpack.c.l.b16 %v396
        %v917 = vunpack.c.l.b16 %v397
        %v918 = vunpack.c.l.b16 %v398
        %v919 = vunpack.c.l.b16 %v399
        %v920 = vunpack.c.l.b16 %v400
        %v921 = vunpack.c.l.b16 %v401
        %v922 = vunpack.c.l.b16 %v402
        %v923 = vunpack.c.l.b16 %v403
        %v924 = vunpack.c.l.b16 %v404
        %v925 = vunpack.c.l.b16 %v405
        %v926 = vunpack.c.l.b16 %v406
        %v927 = vunpack.c.l.b16 %v407
        %v928 = vunpack.c.l.b16 %v408
        %v929 = vunpack.c.l.b16 %v409
        %v930 = vunpack.c.l.b16 %v410
        %v931 = vunpack.c.l.b16 %v411
        %v932 = vunpack.c.l.b16 %v412
        %v933 = vunpack.c.l.b16 %v413
        %v934 = vunpack.c.l.b16 %v414
        %v935 = vunpack.c.l.b16 %v415
        %v936 = vunpack.c.l.b16 %v416
        %v937 = vunpack.c.l.b16 %v417
        %v938 = vunpack.c.l.b16 %v418
        %v939 = vunpack.c.l.b16 %v419
        %v940 = vunpack.c.l.b16 %v420
        %v941 = vunpack.c.l.b16 %v421
        %v942 = vunpack.c.l.b16 %v422
        %v943 = vunpack.c.l.b16 %v423
        %v944 = vunpack.c.l.b16 %v424
        %v945 = vunpack.c.l.b16 %v425
        %v946 = vunpack.c.l.b16 %v426
        %v947 = vunpack.c.l.b16 %v427
        %v948 = vunpack.c.l.b16 %v428
        %v949 = vunpack.c.l.b16 %v429
        %v950 = vunpack.c.l.b16 %v430
        %v951 = vunpack.c.l.b16 %v431
        %v952 = vunpack.c.l.b16 %v432
        %v953 = vunpack.c.l.b16 %v433
        %v954 = vunpack.c.l.b16 %v434
        %v955 = vunpack.c.l.b16 %v435
        %v956 = vunpack.c.l.b16 %v436
        %v957 = vunpack.c.l.b16 %v437
        %v958 = vunpack.c.l.b16 %v438
        %v959 = vunpack.c.l.b16 %v439
        %v960 = vunpack.c.l.b16 %v440
        %v961 = vunpack.c.l.b16 %v441
        %v962 = vunpack.c.l.b16 %v442
        %v963 = vunpack.c.l.b16 %v443
        %v964 = vunpack.c.l.b16 %v444
        %v965 = vunpack.c.l.b16 %v445
        %v966 = vunpack.c.l.b16 %v446
        %v967 = vunpack.c.l.b16 %v447
        %v968 = vunpack.c.l.b16 %v448
        %v969 = vunpack.c.l.b16 %v449
        %v970 = vunpack.c.l.b16 %v450
        %v971 = vunpack.c.l.b16 %v451
        %v972 = vunpack.c.l.b16 %v452
        %v973 = vunpack.c.l.b16 %v453
        %v974 = vunpack.c.l.b16 %v454
        %v975 = vunpack.c.l.b16 %v455
        %v976 = vunpack.c.l.b16 %v456
        %v977 = vunpack.c.l.b16 %v457
        %v978 = vunpack.c.l.b16 %v458
        %v979 = vunpack.c.l.b16 %v459
        %v980 = vunpack.c.l.b16 %v460
        %v981 = vunpack.c.l.b16 %v461
        %v982 = vunpack.c.l.b16 %v462
        %v983 = vunpack.c.l.b16 %v463
        %v984 = vunpack.c.l.b16 %v464
        %v985 = vunpack.c.l.b16 %v465
        %v986 = vunpack.c.l.b16 %v466
        %v987 = vunpack.c.l.b16 %v467
        %v988 = vunpack.c.l.b16 %v468
        %v989 = vunpack.c.l.b16 %v469
        %v990 = vunpack.c.l.b16 %v470
        %v991 = vunpack.c.l.b16 %v471
        %v992 = vunpack.c.l.b16 %v472
        %v993 = vunpack.c.l.b16 %v473
        %v994 = vunpack.c.l.b16 %v474
        %v995 = vunpack.c.l.b16 %v475
        %v996 = vunpack.c.l.b16 %v476
        %v997 = vunpack.c.l.b16 %v477
        %v998 = vunpack.c.l.b16 %v478
        %v999 = vunpack.c.l.b16 %v479
        %v1000 = vunpack.c.l.b16 %v480
        %v1001 = vunpack.c.l.b16 %v481
        %v1002 = vunpack.c.l.b16 %v482
        %v1003 = vunpack.c.l.b16 %v483
        %v1004 = vunpack.c.l.b16 %v484
        %v1005 = vunpack.c.l.b16 %v485
        %v1006 = vunpack.c.l.b16 %v486
        %v1007 = vunpack.c.l.b16 %v487
        %v1008 = vunpack.c.l.b16 %v488
        %v1009 = vunpack.c.l.b16 %v489
        %v1010 = vunpack.c.l.b16 %v490
        %v1011 = vunpack.c.l.b16 %v491
        %v1012 = vunpack.c.l.b16 %v492
        %v1013 = vunpack.c.l.b16 %v493
        %v1014 = vunpack.c.l.b16 %v494
        %v1015 = vunpack.c.l.b16 %v495
        %v1016 = vunpack.c.l.b16 %v496
        %v1017 = vunpack.c.l.b16 %v497
        %v1018 = vunpack.c.l.b16 %v498
        %v1019 = vunpack.c.l.b16 %v499
        %v1020 = vunpack.c.l.b16 %v500
        %v1021 = vunpack.c.l.b16 %v501
        %v1022 = vunpack.c.l.b16 %v502
        %v1023 = vunpack.c.l.b16 %v503
        %v1024 = vunpack.c.l.b16 %v504
        %v1025 = vunpack.c.l.b16 %v505
        %v1026 = vunpack.c.l.b16 %v506
        %v1027 = vunpack.c.l.b16 %v507
        %v1028 = vunpack.c.l.b16 %v508
        %v1029 = vunpack.c.l.b16 %v509
        %v1030 = vunpack.c.l.b16 %v510
        %v1031 = vunpack.c.l.b16 %v511
        %v1032 = vunpack.c.l.b16 %v512
        %v1033 = vunpack.c.l.b16 %v513
        %v1034 = vunpack.c.l.b16 %v514
        %v1035 = vunpack.c.l.b16 %v515
        %v1036 = vunpack.c.l.b16 %v516
        %v1037 = vunpack.c.l.b16 %v517
        %v1038 = vunpack.c.l.b16 %v518
        %v1039 = vunpack.c.l.b16 %v519
        %v1040 = vunpack.c.l.b16 %v520
        %v1041 = vunpack.c.l.b16 %v521
        %v1042 = vunpack.c.l.b16 %v522
        %v1043 = vunpack.c.l.b16 %v523
        %v1044 = vunpack.c.l.b16 %v524
        %v1045 = vunpack.c.l.b16 %v525
        %v1046 = vunpack.c.l.b16 %v526
        %v1047 = vunpack.c.l.b16 %v527
        %v1048 = vunpack.c.l.b16 %v528
        %v1049 = vunpack.c.l.b16 %v529
        %v1050 = vunpack.c.l.b16 %v530
        %v1051 = vunpack.c.l.b16 %v531
        %v1052 = vunpack.c.l.b16 %v532
        %v1053 = vunpack.c.l.b16 %v533
        %v1054 = vunpack.c.l.b16 %v534
        %v1055 = vunpack.c.l.b16 %v535
        %v1056 = vunpack.c.l.b16 %v536
        %v1057 = vunpack.c.l.b16 %v537
        %v1058 = vunpack.c.l.b16 %v538
        %v1059 = vunpack.c.l.b16 %v539
        %v1060 = vunpack.c.l.b16 %v540
        %v1061 = vunpack.c.l.b16 %v541
        %v1062 = vunpack.c.l.b16 %v542
        %v1063 = vunpack.c.l.b16 %v543
        %v1064 = vunpack.c.l.b16 %v544
        %v1065 = vunpack.c.l.b16 %v545
        %v1066 = vunpack.c.l.b16 %v546
        %v1067 = vunpack.c.l.b16 %v547
        %v1068 = vunpack.c.l.b16 %v548
        %v1069 = vunpack.c.l.b16 %v549
        %v1070 = vunpack.c.l.b16 %v550
        %v1071 = vunpack.c.l.b16 %v551
        %v1072 = vunpack.c.l.b16 %v552
        %v1073 = vunpack.c.l.b16 %v553
        %v1074 = vunpack.c.l.b16 %v554
        %v1075 = vunpack.c.l.b16 %v555
        %v1076 = vunpack.c.l.b16 %v556
        %v1077 = vunpack.c.l.b16 %v557
        %v1078 = vunpack.c.l.b16 %v558
        %v1079 = vunpack.c.l.b16 %v559
        %v1080 = vunpack.c.l.b16 %v560
        %v1081 = vunpack.c.l.b16 %v561
        %v1082 = vunpack.c.l.b16 %v562
        %v1083 = vunpack.c.l.b16 %v563
        %v1084 = vunpack.c.l.b16 %v564
        %v1085 = vunpack.c.l.b16 %v565
        %v1086 = vunpack.c.l.b16 %v566
        %v1087 = vunpack.c.l.b16 %v567
        %v1088 = vunpack.c.l.b16 %v568
        %v1089 = vunpack.c.l.b16 %v569
        %v1090 = vunpack.c.l.b16 %v570
        %v1091 = vunpack.c.l.b16 %v571
        %v1092 = vunpack.c.l.b16 %v572
        %v1093 = vunpack.c.l.b16 %v573
        %v1094 = vunpack.c.l.b16 %v574
        %v1095 = vunpack.c.l.b16 %v575
        %v1096 = vunpack.c.l.b16 %v576
        %v1097 = vunpack.c.l.b16 %v577
        %v1098 = vunpack.c.l.b16 %v578
        %v1099 = vunpack.c.l.b16 %v579
        %v1100 = vunpack.c.l.b16 %v580
        %v1101 = vunpack.c.l.b16 %v581
        %v1102 = vunpack.c.l.b16 %v582
        %v1103 = vunpack.c.l.b16 %v583
        %v1104 = vunpack.c.l.b16 %v584
        %v1105 = vunpack.c.l.b16 %v585
        %v1106 = vunpack.c.l.b16 %v586
        %v1107 = vunpack.c.l.b16 %v587
        %v1108 = vunpack.c.l.b16 %v588
        %v1109 = vunpack.c.l.b16 %v589
        %v1110 = vunpack.c.l.b16 %v590
        %v1111 = vunpack.c.l.b16 %v591
        %v1112 = vunpack.c.l.b16 %v592
        %v1113 = vunpack.c.l.b16 %v593
        %v1114 = vunpack.c.l.b16 %v594
        %v1115 = vunpack.c.l.b16 %v595
        %v1116 = vunpack.c.l.b16 %v596
        %v1117 = vunpack.c.l.b16 %v597
        %v1118 = vunpack.c.l.b16 %v598
        %v1119 = vunpack.c.l.b16 %v599
        %v1120 = vunpack.c.l.b16 %v600
        %v1121 = vpack.c.b16 %v866, %v865
        %v1122 = vpack.c.b16 %v868, %v867
        %v1123 = vpack.c.b16 %v870, %v869
        %v1124 = vpack.c.b16 %v872, %v871
        %v1125 = vpack.c.b16 %v874, %v873
        %v1126 = vpack.c.b16 %v876, %v875
        %v1127 = vpack.c.b16 %v878, %v877
        %v1128 = vpack.c.b16 %v880, %v879
        %v1129 = vpack.c.b16 %v882, %v881
        %v1130 = vpack.c.b16 %v884, %v883
        %v1131 = vpack.c.b16 %v886, %v885
        %v1132 = vpack.c.b16 %v888, %v887
        %v1133 = vpack.c.b16 %v890, %v889
        %v1134 = vpack.c.b16 %v892, %v891
        %v1135 = vpack.c.b16 %v894, %v893
        %v1136 = vpack.c.b16 %v896, %v895
        %v1137 = vpack.c.b16 %v898, %v897
        %v1138 = vpack.c.b16 %v900, %v899
        %v1139 = vpack.c.b16 %v902, %v901
        %v1140 = vpack.c.b16 %v904, %v903
        %v1141 = vpack.c.b16 %v906, %v905
        %v1142 = vpack.c.b16 %v908, %v907
        %v1143 = vpack.c.b16 %v910, %v909
        %v1144 = vpack.c.b16 %v912, %v911
        %v1145 = vpack.c.b16 %v914, %v913
        %v1146 = vpack.c.b16 %v916, %v915
        %v1147 = vpack.c.b16 %v918, %v917
        %v1148 = vpack.c.b16 %v920, %v919
        %v1149 = vpack.c.b16 %v922, %v921
        %v1150 = vpack.c.b16 %v924, %v923
        %v1151 = vpack.c.b16 %v926, %v925
        %v1152 = vpack.c.b16 %v928, %v927
        %v1153 = vpack.c.b16 %v930, %v929
        %v1154 = vpack.c.b16 %v932, %v931
        %v1155 = vpack.c.b16 %v934, %v933
        %v1156 = vpack.c.b16 %v936, %v935
        %v1157 = vpack.c.b16 %v938, %v937
        %v1158 = vpack.c.b16 %v940, %v939
        %v1159 = vpack.c.b16 %v942, %v941
        %v1160 = vpack.c.b16 %v944, %v943
        %v1161 = vpack.c.b16 %v946, %v945
        %v1162 = vpack.c.b16 %v948, %v947
        %v1163 = vpack.c.b16 %v950, %v949
        %v1164 = vpack.c.b16 %v952, %v951
        %v1165 = vpack.c.b16 %v954, %v953
        %v1166 = vpack.c.b16 %v956, %v955
        %v1167 = vpack.c.b16 %v958, %v957
        %v1168 = vpack.c.b16 %v960, %v959
        %v1169 = vpack.c.b16 %v962, %v961
        %v1170 = vpack.c.b16 %v964, %v963
        %v1171 = vpack.c.b16 %v966, %v965
        %v1172 = vpack.c.b16 %v968, %v967
        %v1173 = vpack.c.b16 %v970, %v969
        %v1174 = vpack.c.b16 %v972, %v971
        %v1175 = vpack.c.b16 %v974, %v973
        %v1176 = vpack.c.b16 %v976, %v975
        %v1177 = vpack.c.b16 %v978, %v977
        %v1178 = vpack.c.b16 %v980, %v979
        %v1179 = vpack.c.b16 %v982, %v981
        %v1180 = vpack.c.b16 %v984, %v983
        %v1181 = vpack.c.b16 %v986, %v985
        %v1182 = vpack.c.b16 %v988, %v987
        %v1183 = vpack.c.b16 %v990, %v989
        %v1184 = vpack.c.b16 %v992, %v991
        %v1185 = vpack.c.b16 %v994, %v993
        %v1186 = vpack.c.b16 %v996, %v995
        %v1187 = vpack.c.b16 %v998, %v997
        %v1188 = vpack.c.b16 %v1000, %v999
        %v1189 = vpack.c.b16 %v1002, %v1001
        %v1190 = vpack.c.b16 %v1004, %v1003
        %v1191 = vpack.c.b16 %v1006, %v1005
        %v1192 = vpack.c.b16 %v1008, %v1007
        %v1193 = vpack.c.b16 %v1010, %v1009
        %v1194 = vpack.c.b16 %v1012, %v1011
        %v1195 = vpack.c.b16 %v1014, %v1013
        %v1196 = vpack.c.b16 %v1016, %v1015
        %v1197 = vpack.c.b16 %v1018, %v1017
        %v1198 = vpack.c.b16 %v1020, %v1019
        %v1199 = vpack.c.b16 %v1022, %v1021
        %v1200 = vpack.c.b16 %v1024, %v1023
        %v1201 = vpack.c.b16 %v1026, %v1025
        %v1202 = vpack.c.b16 %v1028, %v1027
        %v1203 = vpack.c.b16 %v1030, %v1029
        %v1204 = vpack.c.b16 %v1032, %v1031
        %v1205 = vpack.c.b16 %v1034, %v1033
        %v1206 = vpack.c.b16 %v1036, %v1035
        %v1207 = vpack.c.b16 %v1038, %v1037
        %v1208 = vpack.c.b16 %v1040, %v1039
        %v1209 = vpack.c.b16 %v1042, %v1041
        %v1210 = vpack.c.b16 %v1044, %v1043
        %v1211 = vpack.c.b16 %v1046, %v1045
        %v1212 = vpack.c.b16 %v1048, %v1047
        %v1213 = vpack.c.b16 %v1050, %v1049
        %v1214 = vpack.c.b16 %v1052, %v1051
        %v1215 = vpack.c.b16 %v1054, %v1053
        %v1216 = vpack.c.b16 %v1056, %v1055
        %v1217 = vpack.c.b16 %v1058, %v1057
        %v1218 = vpack.c.b16 %v1060, %v1059
        %v1219 = vpack.c.b16 %v1062, %v1061
        %v1220 = vpack.c.b16 %v1064, %v1063
        %v1221 = vpack.c.b16 %v1066, %v1065
        %v1222 = vpack.c.b16 %v1068, %v1067
        %v1223 = vpack.c.b16 %v1070, %v1069
        %v1224 = vpack.c.b16 %v1072, %v1071
        %v1225 = vpack.c.b16 %v1074, %v1073
        %v1226 = vpack.c.b16 %v1076, %v1075
        %v1227 = vpack.c.b16 %v1078, %v1077
        %v1228 = vpack.c.b16 %v1080, %v1079
        %v1229 = vpack.c.b16 %v1082, %v1081
        %v1230 = vpack.c.b16 %v1084, %v1083
        %v1231 = vpack.c.b16 %v1086, %v1085
        %v1232 = vpack.c.b16 %v1088, %v1087
        %v1233 = vpack.c.b16 %v1090, %v1089
        %v1234 = vpack.c.b16 %v1092, %v1091
        %v1235 = vpack.c.b16 %v1094, %v1093
        %v1236 = vpack.c.b16 %v1096, %v1095
        %v1237 = vpack.c.b16 %v1098, %v1097
        %v1238 = vpack.c.b16 %v1100, %v1099
        %v1239 = vpack.c.b16 %v1102, %v1101
        %v1240 = vpack.c.b16 %v1104, %v1103
        %v1241 = vpack.c.b16 %v1106, %v1105
        %v1242 = vpack.c.b16 %v1108, %v1107
        %v1243 = vpack.c.b16 %v1110, %v1109
        %v1244 = vpack.c.b16 %v1112, %v1111
        %v1245 = vpack.c.b16 %v1114, %v1113
        %v1246 = vpack.c.b16 %v1116, %v1115
        %v1247 = vpack.c.b16 %v1118, %v1117
        %v1248 = vpack.c.b16 %v1120, %v1119
        %v1253 = vunpack.c.l.b16 %v601
        %v1254 = vunpack.c.l.b16 %v602
        %v1255 = vunpack.c.l.b16 %v603
        %v1256 = vunpack.c.l.b16 %v604
        %v1257 = vpack.c.b16 %v1254, %v1253
        %v1258 = vpack.c.b16 %v1256, %v1255
        %vm1260 = vcmask 220160
        %v1262 = vsel %vm1260, %v1121, 0
        %v1265 = vsel %vm1260, %v1122, 0
        %v1268 = vsel %vm1260, %v1123, 0
        %v1271 = vsel %vm1260, %v1124, 0
        %v1274 = vsel %vm1260, %v1125, 0
        %v1277 = vsel %vm1260, %v1126, 0
        %v1280 = vsel %vm1260, %v1127, 0
        %v1283 = vsel %vm1260, %v1128, 0
        %v1286 = vsel %vm1260, %v1129, 0
        %v1289 = vsel %vm1260, %v1130, 0
        %v1292 = vsel %vm1260, %v1131, 0
        %v1295 = vsel %vm1260, %v1132, 0
        %v1298 = vsel %vm1260, %v1133, 0
        %v1301 = vsel %vm1260, %v1134, 0
        %v1304 = vsel %vm1260, %v1135, 0
        %v1307 = vsel %vm1260, %v1136, 0
        %v1310 = vsel %vm1260, %v1137, 0
        %v1313 = vsel %vm1260, %v1138, 0
        %v1316 = vsel %vm1260, %v1139, 0
        %v1319 = vsel %vm1260, %v1140, 0
        %v1322 = vsel %vm1260, %v1141, 0
        %v1325 = vsel %vm1260, %v1142, 0
        %v1328 = vsel %vm1260, %v1143, 0
        %v1331 = vsel %vm1260, %v1144, 0
        %v1334 = vsel %vm1260, %v1145, 0
        %v1337 = vsel %vm1260, %v1146, 0
        %v1340 = vsel %vm1260, %v1147, 0
        %v1343 = vsel %vm1260, %v1148, 0
        %v1346 = vsel %vm1260, %v1149, 0
        %v1349 = vsel %vm1260, %v1150, 0
        %v1352 = vsel %vm1260, %v1151, 0
        %v1355 = vsel %vm1260, %v1152, 0
        %v1358 = vsel %vm1260, %v1153, 0
        %v1361 = vsel %vm1260, %v1154, 0
        %v1364 = vsel %vm1260, %v1155, 0
        %v1367 = vsel %vm1260, %v1156, 0
        %v1370 = vsel %vm1260, %v1157, 0
        %v1373 = vsel %vm1260, %v1158, 0
        %v1376 = vsel %vm1260, %v1159, 0
        %v1379 = vsel %vm1260, %v1160, 0
        %v1382 = vsel %vm1260, %v1161, 0
        %v1385 = vsel %vm1260, %v1162, 0
        %v1388 = vsel %vm1260, %v1163, 0
        %v1391 = vsel %vm1260, %v1164, 0
        %v1394 = vsel %vm1260, %v1165, 0
        %v1397 = vsel %vm1260, %v1166, 0
        %v1400 = vsel %vm1260, %v1167, 0
        %v1403 = vsel %vm1260, %v1168, 0
        %v1406 = vsel %vm1260, %v1169, 0
        %v1409 = vsel %vm1260, %v1170, 0
        %v1412 = vsel %vm1260, %v1171, 0
        %v1415 = vsel %vm1260, %v1172, 0
        %v1418 = vsel %vm1260, %v1173, 0
        %v1421 = vsel %vm1260, %v1174, 0
        %v1424 = vsel %vm1260, %v1175, 0
        %v1427 = vsel %vm1260, %v1176, 0
        %v1430 = vsel %vm1260, %v1177, 0
        %v1433 = vsel %vm1260, %v1178, 0
        %v1436 = vsel %vm1260, %v1179, 0
        %v1439 = vsel %vm1260, %v1180, 0
        %v1442 = vsel %vm1260, %v1181, 0
        %v1445 = vsel %vm1260, %v1182, 0
        %v1448 = vsel %vm1260, %v1183, 0
        %v1451 = vsel %vm1260, %v1184, 0
        %v1454 = vsel %vm1260, %v1185, 0
        %v1457 = vsel %vm1260, %v1186, 0
        %v1460 = vsel %vm1260, %v1187, 0
        %v1463 = vsel %vm1260, %v1188, 0
        %v1466 = vsel %vm1260, %v1189, 0
        %v1469 = vsel %vm1260, %v1190, 0
        %v1472 = vsel %vm1260, %v1191, 0
        %v1475 = vsel %vm1260, %v1192, 0
        %v1478 = vsel %vm1260, %v1193, 0
        %v1481 = vsel %vm1260, %v1194, 0
        %v1484 = vsel %vm1260, %v1195, 0
        %v1487 = vsel %vm1260, %v1196, 0
        %v1490 = vsel %vm1260, %v1197, 0
        %v1493 = vsel %vm1260, %v1198, 0
        %v1496 = vsel %vm1260, %v1199, 0
        %v1499 = vsel %vm1260, %v1200, 0
        %v1502 = vsel %vm1260, %v1201, 0
        %v1505 = vsel %vm1260, %v1202, 0
        %v1508 = vsel %vm1260, %v1203, 0
        %v1511 = vsel %vm1260, %v1204, 0
        %v1514 = vsel %vm1260, %v1205, 0
        %v1517 = vsel %vm1260, %v1206, 0
        %v1520 = vsel %vm1260, %v1207, 0
        %v1523 = vsel %vm1260, %v1208, 0
        %v1526 = vsel %vm1260, %v1209, 0
        %v1529 = vsel %vm1260, %v1210, 0
        %v1532 = vsel %vm1260, %v1211, 0
        %v1535 = vsel %vm1260, %v1212, 0
        %v1538 = vsel %vm1260, %v1213, 0
        %v1541 = vsel %vm1260, %v1214, 0
        %v1544 = vsel %vm1260, %v1215, 0
        %v1547 = vsel %vm1260, %v1216, 0
        %v1550 = vsel %vm1260, %v1217, 0
        %v1553 = vsel %vm1260, %v1218, 0
        %v1556 = vsel %vm1260, %v1219, 0
        %v1559 = vsel %vm1260, %v1220, 0
        %v1562 = vsel %vm1260, %v1221, 0
        %v1565 = vsel %vm1260, %v1222, 0
        %v1568 = vsel %vm1260, %v1223, 0
        %v1571 = vsel %vm1260, %v1224, 0
        %v1574 = vsel %vm1260, %v1225, 0
        %v1577 = vsel %vm1260, %v1226, 0
        %v1580 = vsel %vm1260, %v1227, 0
        %v1583 = vsel %vm1260, %v1228, 0
        %v1586 = vsel %vm1260, %v1229, 0
        %v1589 = vsel %vm1260, %v1230, 0
        %v1592 = vsel %vm1260, %v1231, 0
        %v1595 = vsel %vm1260, %v1232, 0
        %v1598 = vsel %vm1260, %v1233, 0
        %v1601 = vsel %vm1260, %v1234, 0
        %v1604 = vsel %vm1260, %v1235, 0
        %v1607 = vsel %vm1260, %v1236, 0
        %v1610 = vsel %vm1260, %v1237, 0
        %v1613 = vsel %vm1260, %v1238, 0
        %v1616 = vsel %vm1260, %v1239, 0
        %v1619 = vsel %vm1260, %v1240, 0
        %v1622 = vsel %vm1260, %v1241, 0
        %v1625 = vsel %vm1260, %v1242, 0
        %v1628 = vsel %vm1260, %v1243, 0
        %v1631 = vsel %vm1260, %v1244, 0
        %v1634 = vsel %vm1260, %v1245, 0
        %v1637 = vsel %vm1260, %v1246, 0
        %v1640 = vsel %vm1260, %v1247, 0
        %v1643 = vsel %vm1260, %v1248, 0
        %vm1645 = vcmask 1044480
        %vm1646 = vcmask 1045504
        %v1647 = vsel %vm1645, 4294967295, 65535
        %v1648 = vsel %vm1646, %v1647, 0
        %v1650 = vand.u32 %v1258, %v1648
        %1652 = vmatpush.bf16.msra.mxu0 0
        %1653 = vmatpush.bf16.msra.mxu0 0
        %1654 = vmatpush.bf16.msra.mxu0 0
        %1655 = vmatpush.bf16.msra.mxu0 0
        %1656 = vmatpush.bf16.msra.mxu0 0
        %1657 = vmatpush.bf16.msra.mxu0 0
        %1658 = vmatpush.bf16.msra.mxu0 %v1650
        %1659 = vmatpush.bf16.msra.mxu0 %v1257
        %1660 = vmatmul.bf16.gmra.mxu0 %v1262
        %v1661 = vpop.f32.mrf.mxu0
        %v1662 = vadd.f32 %v607, %v1661
        %v1663 = vpop.f32.mrf.mxu0
        %v1664 = vadd.f32 %v607, %v1663
        %1665 = vmatmul.bf16.gmra.mxu0 %v1265
        %v1666 = vpop.f32.mrf.mxu0
        %v1667 = vadd.f32 %v607, %v1666
        %v1668 = vpop.f32.mrf.mxu0
        %v1669 = vadd.f32 %v607, %v1668
        %1670 = vmatmul.bf16.gmra.mxu0 %v1268
        %v1671 = vpop.f32.mrf.mxu0
        %v1672 = vadd.f32 %v607, %v1671
        %v1673 = vpop.f32.mrf.mxu0
        %v1674 = vadd.f32 %v607, %v1673
        %1675 = vmatmul.bf16.gmra.mxu0 %v1271
        %v1676 = vpop.f32.mrf.mxu0
        %v1677 = vadd.f32 %v607, %v1676
        %v1678 = vpop.f32.mrf.mxu0
        %v1679 = vadd.f32 %v607, %v1678
        %1680 = vmatmul.bf16.gmra.mxu0 %v1274
        %v1681 = vpop.f32.mrf.mxu0
        %v1682 = vadd.f32 %v607, %v1681
        %v1683 = vpop.f32.mrf.mxu0
        %v1684 = vadd.f32 %v607, %v1683
        %1685 = vmatmul.bf16.gmra.mxu0 %v1277
        %v1686 = vpop.f32.mrf.mxu0
        %v1687 = vadd.f32 %v607, %v1686
        %v1688 = vpop.f32.mrf.mxu0
        %v1689 = vadd.f32 %v607, %v1688
        %1690 = vmatmul.bf16.gmra.mxu0 %v1280
        %v1691 = vpop.f32.mrf.mxu0
        %v1692 = vadd.f32 %v607, %v1691
        %v1693 = vpop.f32.mrf.mxu0
        %v1694 = vadd.f32 %v607, %v1693
        %1695 = vmatmul.bf16.gmra.mxu0 %v1283
        %v1696 = vpop.f32.mrf.mxu0
        %v1697 = vadd.f32 %v607, %v1696
        %v1698 = vpop.f32.mrf.mxu0
        %v1699 = vadd.f32 %v607, %v1698
        %1700 = vmatmul.bf16.gmra.mxu0 %v1286
        %v1701 = vpop.f32.mrf.mxu0
        %v1702 = vadd.f32 %v607, %v1701
        %v1703 = vpop.f32.mrf.mxu0
        %v1704 = vadd.f32 %v607, %v1703
        %1705 = vmatmul.bf16.gmra.mxu0 %v1289
        %v1706 = vpop.f32.mrf.mxu0
        %v1707 = vadd.f32 %v607, %v1706
        %v1708 = vpop.f32.mrf.mxu0
        %v1709 = vadd.f32 %v607, %v1708
        %1710 = vmatmul.bf16.gmra.mxu0 %v1292
        %v1711 = vpop.f32.mrf.mxu0
        %v1712 = vadd.f32 %v607, %v1711
        %v1713 = vpop.f32.mrf.mxu0
        %v1714 = vadd.f32 %v607, %v1713
        %1715 = vmatmul.bf16.gmra.mxu0 %v1295
        %v1716 = vpop.f32.mrf.mxu0
        %v1717 = vadd.f32 %v607, %v1716
        %v1718 = vpop.f32.mrf.mxu0
        %v1719 = vadd.f32 %v607, %v1718
        %1720 = vmatmul.bf16.gmra.mxu0 %v1298
        %v1721 = vpop.f32.mrf.mxu0
        %v1722 = vadd.f32 %v607, %v1721
        %v1723 = vpop.f32.mrf.mxu0
        %v1724 = vadd.f32 %v607, %v1723
        %1725 = vmatmul.bf16.gmra.mxu0 %v1301
        %v1726 = vpop.f32.mrf.mxu0
        %v1727 = vadd.f32 %v607, %v1726
        %v1728 = vpop.f32.mrf.mxu0
        %v1729 = vadd.f32 %v607, %v1728
        %1730 = vmatmul.bf16.gmra.mxu0 %v1304
        %v1731 = vpop.f32.mrf.mxu0
        %v1732 = vadd.f32 %v607, %v1731
        %v1733 = vpop.f32.mrf.mxu0
        %v1734 = vadd.f32 %v607, %v1733
        %1735 = vmatmul.bf16.gmra.mxu0 %v1307
        %v1736 = vpop.f32.mrf.mxu0
        %v1737 = vadd.f32 %v607, %v1736
        %v1738 = vpop.f32.mrf.mxu0
        %v1739 = vadd.f32 %v607, %v1738
        %1740 = vmatmul.bf16.gmra.mxu0 %v1310
        %v1741 = vpop.f32.mrf.mxu0
        %v1742 = vadd.f32 %v607, %v1741
        %v1743 = vpop.f32.mrf.mxu0
        %v1744 = vadd.f32 %v607, %v1743
        %1745 = vmatmul.bf16.gmra.mxu0 %v1313
        %v1746 = vpop.f32.mrf.mxu0
        %v1747 = vadd.f32 %v607, %v1746
        %v1748 = vpop.f32.mrf.mxu0
        %v1749 = vadd.f32 %v607, %v1748
        %1750 = vmatmul.bf16.gmra.mxu0 %v1316
        %v1751 = vpop.f32.mrf.mxu0
        %v1752 = vadd.f32 %v607, %v1751
        %v1753 = vpop.f32.mrf.mxu0
        %v1754 = vadd.f32 %v607, %v1753
        %1755 = vmatmul.bf16.gmra.mxu0 %v1319
        %v1756 = vpop.f32.mrf.mxu0
        %v1757 = vadd.f32 %v607, %v1756
        %v1758 = vpop.f32.mrf.mxu0
        %v1759 = vadd.f32 %v607, %v1758
        %1760 = vmatmul.bf16.gmra.mxu0 %v1322
        %v1761 = vpop.f32.mrf.mxu0
        %v1762 = vadd.f32 %v607, %v1761
        %v1763 = vpop.f32.mrf.mxu0
        %v1764 = vadd.f32 %v607, %v1763
        %1765 = vmatmul.bf16.gmra.mxu0 %v1325
        %v1766 = vpop.f32.mrf.mxu0
        %v1767 = vadd.f32 %v607, %v1766
        %v1768 = vpop.f32.mrf.mxu0
        %v1769 = vadd.f32 %v607, %v1768
        %1770 = vmatmul.bf16.gmra.mxu0 %v1328
        %v1771 = vpop.f32.mrf.mxu0
        %v1772 = vadd.f32 %v607, %v1771
        %v1773 = vpop.f32.mrf.mxu0
        %v1774 = vadd.f32 %v607, %v1773
        %1775 = vmatmul.bf16.gmra.mxu0 %v1331
        %v1776 = vpop.f32.mrf.mxu0
        %v1777 = vadd.f32 %v607, %v1776
        %v1778 = vpop.f32.mrf.mxu0
        %v1779 = vadd.f32 %v607, %v1778
        %1780 = vmatmul.bf16.gmra.mxu0 %v1334
        %v1781 = vpop.f32.mrf.mxu0
        %v1782 = vadd.f32 %v607, %v1781
        %v1783 = vpop.f32.mrf.mxu0
        %v1784 = vadd.f32 %v607, %v1783
        %1785 = vmatmul.bf16.gmra.mxu0 %v1337
        %v1786 = vpop.f32.mrf.mxu0
        %v1787 = vadd.f32 %v607, %v1786
        %v1788 = vpop.f32.mrf.mxu0
        %v1789 = vadd.f32 %v607, %v1788
        %1790 = vmatmul.bf16.gmra.mxu0 %v1340
        %v1791 = vpop.f32.mrf.mxu0
        %v1792 = vadd.f32 %v607, %v1791
        %v1793 = vpop.f32.mrf.mxu0
        %v1794 = vadd.f32 %v607, %v1793
        %1795 = vmatmul.bf16.gmra.mxu0 %v1343
        %v1796 = vpop.f32.mrf.mxu0
        %v1797 = vadd.f32 %v607, %v1796
        %v1798 = vpop.f32.mrf.mxu0
        %v1799 = vadd.f32 %v607, %v1798
        %1800 = vmatmul.bf16.gmra.mxu0 %v1346
        %v1801 = vpop.f32.mrf.mxu0
        %v1802 = vadd.f32 %v607, %v1801
        %v1803 = vpop.f32.mrf.mxu0
        %v1804 = vadd.f32 %v607, %v1803
        %1805 = vmatmul.bf16.gmra.mxu0 %v1349
        %v1806 = vpop.f32.mrf.mxu0
        %v1807 = vadd.f32 %v607, %v1806
        %v1808 = vpop.f32.mrf.mxu0
        %v1809 = vadd.f32 %v607, %v1808
        %1810 = vmatmul.bf16.gmra.mxu0 %v1352
        %v1811 = vpop.f32.mrf.mxu0
        %v1812 = vadd.f32 %v607, %v1811
        %v1813 = vpop.f32.mrf.mxu0
        %v1814 = vadd.f32 %v607, %v1813
        %1815 = vmatmul.bf16.gmra.mxu0 %v1355
        %v1816 = vpop.f32.mrf.mxu0
        %v1817 = vadd.f32 %v607, %v1816
        %v1818 = vpop.f32.mrf.mxu0
        %v1819 = vadd.f32 %v607, %v1818
        %1820 = vmatmul.bf16.gmra.mxu0 %v1358
        %v1821 = vpop.f32.mrf.mxu0
        %v1822 = vadd.f32 %v607, %v1821
        %v1823 = vpop.f32.mrf.mxu0
        %v1824 = vadd.f32 %v607, %v1823
        %1825 = vmatmul.bf16.gmra.mxu0 %v1361
        %v1826 = vpop.f32.mrf.mxu0
        %v1827 = vadd.f32 %v607, %v1826
        %v1828 = vpop.f32.mrf.mxu0
        %v1829 = vadd.f32 %v607, %v1828
        %1830 = vmatmul.bf16.gmra.mxu0 %v1364
        %v1831 = vpop.f32.mrf.mxu0
        %v1832 = vadd.f32 %v607, %v1831
        %v1833 = vpop.f32.mrf.mxu0
        %v1834 = vadd.f32 %v607, %v1833
        %1835 = vmatmul.bf16.gmra.mxu0 %v1367
        %v1836 = vpop.f32.mrf.mxu0
        %v1837 = vadd.f32 %v607, %v1836
        %v1838 = vpop.f32.mrf.mxu0
        %v1839 = vadd.f32 %v607, %v1838
        %1840 = vmatmul.bf16.gmra.mxu0 %v1370
        %v1841 = vpop.f32.mrf.mxu0
        %v1842 = vadd.f32 %v607, %v1841
        %v1843 = vpop.f32.mrf.mxu0
        %v1844 = vadd.f32 %v607, %v1843
        %1845 = vmatmul.bf16.gmra.mxu0 %v1373
        %v1846 = vpop.f32.mrf.mxu0
        %v1847 = vadd.f32 %v607, %v1846
        %v1848 = vpop.f32.mrf.mxu0
        %v1849 = vadd.f32 %v607, %v1848
        %1850 = vmatmul.bf16.gmra.mxu0 %v1376
        %v1851 = vpop.f32.mrf.mxu0
        %v1852 = vadd.f32 %v607, %v1851
        %v1853 = vpop.f32.mrf.mxu0
        %v1854 = vadd.f32 %v607, %v1853
        %1855 = vmatmul.bf16.gmra.mxu0 %v1379
        %v1856 = vpop.f32.mrf.mxu0
        %v1857 = vadd.f32 %v607, %v1856
        %v1858 = vpop.f32.mrf.mxu0
        %v1859 = vadd.f32 %v607, %v1858
        %1860 = vmatmul.bf16.gmra.mxu0 %v1382
        %v1861 = vpop.f32.mrf.mxu0
        %v1862 = vadd.f32 %v607, %v1861
        %v1863 = vpop.f32.mrf.mxu0
        %v1864 = vadd.f32 %v607, %v1863
        %1865 = vmatmul.bf16.gmra.mxu0 %v1385
        %v1866 = vpop.f32.mrf.mxu0
        %v1867 = vadd.f32 %v607, %v1866
        %v1868 = vpop.f32.mrf.mxu0
        %v1869 = vadd.f32 %v607, %v1868
        %1870 = vmatmul.bf16.gmra.mxu0 %v1388
        %v1871 = vpop.f32.mrf.mxu0
        %v1872 = vadd.f32 %v607, %v1871
        %v1873 = vpop.f32.mrf.mxu0
        %v1874 = vadd.f32 %v607, %v1873
        %1875 = vmatmul.bf16.gmra.mxu0 %v1391
        %v1876 = vpop.f32.mrf.mxu0
        %v1877 = vadd.f32 %v607, %v1876
        %v1878 = vpop.f32.mrf.mxu0
        %v1879 = vadd.f32 %v607, %v1878
        %1880 = vmatmul.bf16.gmra.mxu0 %v1394
        %v1881 = vpop.f32.mrf.mxu0
        %v1882 = vadd.f32 %v607, %v1881
        %v1883 = vpop.f32.mrf.mxu0
        %v1884 = vadd.f32 %v607, %v1883
        %1885 = vmatmul.bf16.gmra.mxu0 %v1397
        %v1886 = vpop.f32.mrf.mxu0
        %v1887 = vadd.f32 %v607, %v1886
        %v1888 = vpop.f32.mrf.mxu0
        %v1889 = vadd.f32 %v607, %v1888
        %1890 = vmatmul.bf16.gmra.mxu0 %v1400
        %v1891 = vpop.f32.mrf.mxu0
        %v1892 = vadd.f32 %v607, %v1891
        %v1893 = vpop.f32.mrf.mxu0
        %v1894 = vadd.f32 %v607, %v1893
        %1895 = vmatmul.bf16.gmra.mxu0 %v1403
        %v1896 = vpop.f32.mrf.mxu0
        %v1897 = vadd.f32 %v607, %v1896
        %v1898 = vpop.f32.mrf.mxu0
        %v1899 = vadd.f32 %v607, %v1898
        %1900 = vmatmul.bf16.gmra.mxu0 %v1406
        %v1901 = vpop.f32.mrf.mxu0
        %v1902 = vadd.f32 %v607, %v1901
        %v1903 = vpop.f32.mrf.mxu0
        %v1904 = vadd.f32 %v607, %v1903
        %1905 = vmatmul.bf16.gmra.mxu0 %v1409
        %v1906 = vpop.f32.mrf.mxu0
        %v1907 = vadd.f32 %v607, %v1906
        %v1908 = vpop.f32.mrf.mxu0
        %v1909 = vadd.f32 %v607, %v1908
        %1910 = vmatmul.bf16.gmra.mxu0 %v1412
        %v1911 = vpop.f32.mrf.mxu0
        %v1912 = vadd.f32 %v607, %v1911
        %v1913 = vpop.f32.mrf.mxu0
        %v1914 = vadd.f32 %v607, %v1913
        %1915 = vmatmul.bf16.gmra.mxu0 %v1415
        %v1916 = vpop.f32.mrf.mxu0
        %v1917 = vadd.f32 %v607, %v1916
        %v1918 = vpop.f32.mrf.mxu0
        %v1919 = vadd.f32 %v607, %v1918
        %1920 = vmatmul.bf16.gmra.mxu0 %v1418
        %v1921 = vpop.f32.mrf.mxu0
        %v1922 = vadd.f32 %v607, %v1921
        %v1923 = vpop.f32.mrf.mxu0
        %v1924 = vadd.f32 %v607, %v1923
        %1925 = vmatmul.bf16.gmra.mxu0 %v1421
        %v1926 = vpop.f32.mrf.mxu0
        %v1927 = vadd.f32 %v607, %v1926
        %v1928 = vpop.f32.mrf.mxu0
        %v1929 = vadd.f32 %v607, %v1928
        %1930 = vmatmul.bf16.gmra.mxu0 %v1424
        %v1931 = vpop.f32.mrf.mxu0
        %v1932 = vadd.f32 %v607, %v1931
        %v1933 = vpop.f32.mrf.mxu0
        %v1934 = vadd.f32 %v607, %v1933
        %1935 = vmatmul.bf16.gmra.mxu0 %v1427
        %v1936 = vpop.f32.mrf.mxu0
        %v1937 = vadd.f32 %v607, %v1936
        %v1938 = vpop.f32.mrf.mxu0
        %v1939 = vadd.f32 %v607, %v1938
        %1940 = vmatmul.bf16.gmra.mxu0 %v1430
        %v1941 = vpop.f32.mrf.mxu0
        %v1942 = vadd.f32 %v607, %v1941
        %v1943 = vpop.f32.mrf.mxu0
        %v1944 = vadd.f32 %v607, %v1943
        %1945 = vmatmul.bf16.gmra.mxu0 %v1433
        %v1946 = vpop.f32.mrf.mxu0
        %v1947 = vadd.f32 %v607, %v1946
        %v1948 = vpop.f32.mrf.mxu0
        %v1949 = vadd.f32 %v607, %v1948
        %1950 = vmatmul.bf16.gmra.mxu0 %v1436
        %v1951 = vpop.f32.mrf.mxu0
        %v1952 = vadd.f32 %v607, %v1951
        %v1953 = vpop.f32.mrf.mxu0
        %v1954 = vadd.f32 %v607, %v1953
        %1955 = vmatmul.bf16.gmra.mxu0 %v1439
        %v1956 = vpop.f32.mrf.mxu0
        %v1957 = vadd.f32 %v607, %v1956
        %v1958 = vpop.f32.mrf.mxu0
        %v1959 = vadd.f32 %v607, %v1958
        %1960 = vmatmul.bf16.gmra.mxu0 %v1442
        %v1961 = vpop.f32.mrf.mxu0
        %v1962 = vadd.f32 %v607, %v1961
        %v1963 = vpop.f32.mrf.mxu0
        %v1964 = vadd.f32 %v607, %v1963
        %1965 = vmatmul.bf16.gmra.mxu0 %v1445
        %v1966 = vpop.f32.mrf.mxu0
        %v1967 = vadd.f32 %v607, %v1966
        %v1968 = vpop.f32.mrf.mxu0
        %v1969 = vadd.f32 %v607, %v1968
        %1970 = vmatmul.bf16.gmra.mxu0 %v1448
        %v1971 = vpop.f32.mrf.mxu0
        %v1972 = vadd.f32 %v607, %v1971
        %v1973 = vpop.f32.mrf.mxu0
        %v1974 = vadd.f32 %v607, %v1973
        %1975 = vmatmul.bf16.gmra.mxu0 %v1451
        %v1976 = vpop.f32.mrf.mxu0
        %v1977 = vadd.f32 %v607, %v1976
        %v1978 = vpop.f32.mrf.mxu0
        %v1979 = vadd.f32 %v607, %v1978
        %1980 = vmatmul.bf16.gmra.mxu0 %v1454
        %v1981 = vpop.f32.mrf.mxu0
        %v1982 = vadd.f32 %v607, %v1981
        %v1983 = vpop.f32.mrf.mxu0
        %v1984 = vadd.f32 %v607, %v1983
        %1985 = vmatmul.bf16.gmra.mxu0 %v1457
        %v1986 = vpop.f32.mrf.mxu0
        %v1987 = vadd.f32 %v607, %v1986
        %v1988 = vpop.f32.mrf.mxu0
        %v1989 = vadd.f32 %v607, %v1988
        %1990 = vmatmul.bf16.gmra.mxu0 %v1460
        %v1991 = vpop.f32.mrf.mxu0
        %v1992 = vadd.f32 %v607, %v1991
        %v1993 = vpop.f32.mrf.mxu0
        %v1994 = vadd.f32 %v607, %v1993
        %1995 = vmatmul.bf16.gmra.mxu0 %v1463
        %v1996 = vpop.f32.mrf.mxu0
        %v1997 = vadd.f32 %v607, %v1996
        %v1998 = vpop.f32.mrf.mxu0
        %v1999 = vadd.f32 %v607, %v1998
        %2000 = vmatmul.bf16.gmra.mxu0 %v1466
        %v2001 = vpop.f32.mrf.mxu0
        %v2002 = vadd.f32 %v607, %v2001
        %v2003 = vpop.f32.mrf.mxu0
        %v2004 = vadd.f32 %v607, %v2003
        %2005 = vmatmul.bf16.gmra.mxu0 %v1469
        %v2006 = vpop.f32.mrf.mxu0
        %v2007 = vadd.f32 %v607, %v2006
        %v2008 = vpop.f32.mrf.mxu0
        %v2009 = vadd.f32 %v607, %v2008
        %2010 = vmatmul.bf16.gmra.mxu0 %v1472
        %v2011 = vpop.f32.mrf.mxu0
        %v2012 = vadd.f32 %v607, %v2011
        %v2013 = vpop.f32.mrf.mxu0
        %v2014 = vadd.f32 %v607, %v2013
        %2015 = vmatmul.bf16.gmra.mxu0 %v1475
        %v2016 = vpop.f32.mrf.mxu0
        %v2017 = vadd.f32 %v607, %v2016
        %v2018 = vpop.f32.mrf.mxu0
        %v2019 = vadd.f32 %v607, %v2018
        %2020 = vmatmul.bf16.gmra.mxu0 %v1478
        %v2021 = vpop.f32.mrf.mxu0
        %v2022 = vadd.f32 %v607, %v2021
        %v2023 = vpop.f32.mrf.mxu0
        %v2024 = vadd.f32 %v607, %v2023
        %2025 = vmatmul.bf16.gmra.mxu0 %v1481
        %v2026 = vpop.f32.mrf.mxu0
        %v2027 = vadd.f32 %v607, %v2026
        %v2028 = vpop.f32.mrf.mxu0
        %v2029 = vadd.f32 %v607, %v2028
        %2030 = vmatmul.bf16.gmra.mxu0 %v1484
        %v2031 = vpop.f32.mrf.mxu0
        %v2032 = vadd.f32 %v607, %v2031
        %v2033 = vpop.f32.mrf.mxu0
        %v2034 = vadd.f32 %v607, %v2033
        %2035 = vmatmul.bf16.gmra.mxu0 %v1487
        %v2036 = vpop.f32.mrf.mxu0
        %v2037 = vadd.f32 %v607, %v2036
        %v2038 = vpop.f32.mrf.mxu0
        %v2039 = vadd.f32 %v607, %v2038
        %2040 = vmatmul.bf16.gmra.mxu0 %v1490
        %v2041 = vpop.f32.mrf.mxu0
        %v2042 = vadd.f32 %v607, %v2041
        %v2043 = vpop.f32.mrf.mxu0
        %v2044 = vadd.f32 %v607, %v2043
        %2045 = vmatmul.bf16.gmra.mxu0 %v1493
        %v2046 = vpop.f32.mrf.mxu0
        %v2047 = vadd.f32 %v607, %v2046
        %v2048 = vpop.f32.mrf.mxu0
        %v2049 = vadd.f32 %v607, %v2048
        %2050 = vmatmul.bf16.gmra.mxu0 %v1496
        %v2051 = vpop.f32.mrf.mxu0
        %v2052 = vadd.f32 %v607, %v2051
        %v2053 = vpop.f32.mrf.mxu0
        %v2054 = vadd.f32 %v607, %v2053
        %2055 = vmatmul.bf16.gmra.mxu0 %v1499
        %v2056 = vpop.f32.mrf.mxu0
        %v2057 = vadd.f32 %v607, %v2056
        %v2058 = vpop.f32.mrf.mxu0
        %v2059 = vadd.f32 %v607, %v2058
        %2060 = vmatmul.bf16.gmra.mxu0 %v1502
        %v2061 = vpop.f32.mrf.mxu0
        %v2062 = vadd.f32 %v607, %v2061
        %v2063 = vpop.f32.mrf.mxu0
        %v2064 = vadd.f32 %v607, %v2063
        %2065 = vmatmul.bf16.gmra.mxu0 %v1505
        %v2066 = vpop.f32.mrf.mxu0
        %v2067 = vadd.f32 %v607, %v2066
        %v2068 = vpop.f32.mrf.mxu0
        %v2069 = vadd.f32 %v607, %v2068
        %2070 = vmatmul.bf16.gmra.mxu0 %v1508
        %v2071 = vpop.f32.mrf.mxu0
        %v2072 = vadd.f32 %v607, %v2071
        %v2073 = vpop.f32.mrf.mxu0
        %v2074 = vadd.f32 %v607, %v2073
        %2075 = vmatmul.bf16.gmra.mxu0 %v1511
        %v2076 = vpop.f32.mrf.mxu0
        %v2077 = vadd.f32 %v607, %v2076
        %v2078 = vpop.f32.mrf.mxu0
        %v2079 = vadd.f32 %v607, %v2078
        %2080 = vmatmul.bf16.gmra.mxu0 %v1514
        %v2081 = vpop.f32.mrf.mxu0
        %v2082 = vadd.f32 %v607, %v2081
        %v2083 = vpop.f32.mrf.mxu0
        %v2084 = vadd.f32 %v607, %v2083
        %2085 = vmatmul.bf16.gmra.mxu0 %v1517
        %v2086 = vpop.f32.mrf.mxu0
        %v2087 = vadd.f32 %v607, %v2086
        %v2088 = vpop.f32.mrf.mxu0
        %v2089 = vadd.f32 %v607, %v2088
        %2090 = vmatmul.bf16.gmra.mxu0 %v1520
        %v2091 = vpop.f32.mrf.mxu0
        %v2092 = vadd.f32 %v607, %v2091
        %v2093 = vpop.f32.mrf.mxu0
        %v2094 = vadd.f32 %v607, %v2093
        %2095 = vmatmul.bf16.gmra.mxu0 %v1523
        %v2096 = vpop.f32.mrf.mxu0
        %v2097 = vadd.f32 %v607, %v2096
        %v2098 = vpop.f32.mrf.mxu0
        %v2099 = vadd.f32 %v607, %v2098
        %2100 = vmatmul.bf16.gmra.mxu0 %v1526
        %v2101 = vpop.f32.mrf.mxu0
        %v2102 = vadd.f32 %v607, %v2101
        %v2103 = vpop.f32.mrf.mxu0
        %v2104 = vadd.f32 %v607, %v2103
        %2105 = vmatmul.bf16.gmra.mxu0 %v1529
        %v2106 = vpop.f32.mrf.mxu0
        %v2107 = vadd.f32 %v607, %v2106
        %v2108 = vpop.f32.mrf.mxu0
        %v2109 = vadd.f32 %v607, %v2108
        %2110 = vmatmul.bf16.gmra.mxu0 %v1532
        %v2111 = vpop.f32.mrf.mxu0
        %v2112 = vadd.f32 %v607, %v2111
        %v2113 = vpop.f32.mrf.mxu0
        %v2114 = vadd.f32 %v607, %v2113
        %2115 = vmatmul.bf16.gmra.mxu0 %v1535
        %v2116 = vpop.f32.mrf.mxu0
        %v2117 = vadd.f32 %v607, %v2116
        %v2118 = vpop.f32.mrf.mxu0
        %v2119 = vadd.f32 %v607, %v2118
        %2120 = vmatmul.bf16.gmra.mxu0 %v1538
        %v2121 = vpop.f32.mrf.mxu0
        %v2122 = vadd.f32 %v607, %v2121
        %v2123 = vpop.f32.mrf.mxu0
        %v2124 = vadd.f32 %v607, %v2123
        %2125 = vmatmul.bf16.gmra.mxu0 %v1541
        %v2126 = vpop.f32.mrf.mxu0
        %v2127 = vadd.f32 %v607, %v2126
        %v2128 = vpop.f32.mrf.mxu0
        %v2129 = vadd.f32 %v607, %v2128
        %2130 = vmatmul.bf16.gmra.mxu0 %v1544
        %v2131 = vpop.f32.mrf.mxu0
        %v2132 = vadd.f32 %v607, %v2131
        %v2133 = vpop.f32.mrf.mxu0
        %v2134 = vadd.f32 %v607, %v2133
        %2135 = vmatmul.bf16.gmra.mxu0 %v1547
        %v2136 = vpop.f32.mrf.mxu0
        %v2137 = vadd.f32 %v607, %v2136
        %v2138 = vpop.f32.mrf.mxu0
        %v2139 = vadd.f32 %v607, %v2138
        %2140 = vmatmul.bf16.gmra.mxu0 %v1550
        %v2141 = vpop.f32.mrf.mxu0
        %v2142 = vadd.f32 %v607, %v2141
        %v2143 = vpop.f32.mrf.mxu0
        %v2144 = vadd.f32 %v607, %v2143
        %2145 = vmatmul.bf16.gmra.mxu0 %v1553
        %v2146 = vpop.f32.mrf.mxu0
        %v2147 = vadd.f32 %v607, %v2146
        %v2148 = vpop.f32.mrf.mxu0
        %v2149 = vadd.f32 %v607, %v2148
        %2150 = vmatmul.bf16.gmra.mxu0 %v1556
        %v2151 = vpop.f32.mrf.mxu0
        %v2152 = vadd.f32 %v607, %v2151
        %v2153 = vpop.f32.mrf.mxu0
        %v2154 = vadd.f32 %v607, %v2153
        %2155 = vmatmul.bf16.gmra.mxu0 %v1559
        %v2156 = vpop.f32.mrf.mxu0
        %v2157 = vadd.f32 %v607, %v2156
        %v2158 = vpop.f32.mrf.mxu0
        %v2159 = vadd.f32 %v607, %v2158
        %2160 = vmatmul.bf16.gmra.mxu0 %v1562
        %v2161 = vpop.f32.mrf.mxu0
        %v2162 = vadd.f32 %v607, %v2161
        %v2163 = vpop.f32.mrf.mxu0
        %v2164 = vadd.f32 %v607, %v2163
        %2165 = vmatmul.bf16.gmra.mxu0 %v1565
        %v2166 = vpop.f32.mrf.mxu0
        %v2167 = vadd.f32 %v607, %v2166
        %v2168 = vpop.f32.mrf.mxu0
        %v2169 = vadd.f32 %v607, %v2168
        %2170 = vmatmul.bf16.gmra.mxu0 %v1568
        %v2171 = vpop.f32.mrf.mxu0
        %v2172 = vadd.f32 %v607, %v2171
        %v2173 = vpop.f32.mrf.mxu0
        %v2174 = vadd.f32 %v607, %v2173
        %2175 = vmatmul.bf16.gmra.mxu0 %v1571
        %v2176 = vpop.f32.mrf.mxu0
        %v2177 = vadd.f32 %v607, %v2176
        %v2178 = vpop.f32.mrf.mxu0
        %v2179 = vadd.f32 %v607, %v2178
        %2180 = vmatmul.bf16.gmra.mxu0 %v1574
        %v2181 = vpop.f32.mrf.mxu0
        %v2182 = vadd.f32 %v607, %v2181
        %v2183 = vpop.f32.mrf.mxu0
        %v2184 = vadd.f32 %v607, %v2183
        %2185 = vmatmul.bf16.gmra.mxu0 %v1577
        %v2186 = vpop.f32.mrf.mxu0
        %v2187 = vadd.f32 %v607, %v2186
        %v2188 = vpop.f32.mrf.mxu0
        %v2189 = vadd.f32 %v607, %v2188
        %2190 = vmatmul.bf16.gmra.mxu0 %v1580
        %v2191 = vpop.f32.mrf.mxu0
        %v2192 = vadd.f32 %v607, %v2191
        %v2193 = vpop.f32.mrf.mxu0
        %v2194 = vadd.f32 %v607, %v2193
        %2195 = vmatmul.bf16.gmra.mxu0 %v1583
        %v2196 = vpop.f32.mrf.mxu0
        %v2197 = vadd.f32 %v607, %v2196
        %v2198 = vpop.f32.mrf.mxu0
        %v2199 = vadd.f32 %v607, %v2198
        %2200 = vmatmul.bf16.gmra.mxu0 %v1586
        %v2201 = vpop.f32.mrf.mxu0
        %v2202 = vadd.f32 %v607, %v2201
        %v2203 = vpop.f32.mrf.mxu0
        %v2204 = vadd.f32 %v607, %v2203
        %2205 = vmatmul.bf16.gmra.mxu0 %v1589
        %v2206 = vpop.f32.mrf.mxu0
        %v2207 = vadd.f32 %v607, %v2206
        %v2208 = vpop.f32.mrf.mxu0
        %v2209 = vadd.f32 %v607, %v2208
        %2210 = vmatmul.bf16.gmra.mxu0 %v1592
        %v2211 = vpop.f32.mrf.mxu0
        %v2212 = vadd.f32 %v607, %v2211
        %v2213 = vpop.f32.mrf.mxu0
        %v2214 = vadd.f32 %v607, %v2213
        %2215 = vmatmul.bf16.gmra.mxu0 %v1595
        %v2216 = vpop.f32.mrf.mxu0
        %v2217 = vadd.f32 %v607, %v2216
        %v2218 = vpop.f32.mrf.mxu0
        %v2219 = vadd.f32 %v607, %v2218
        %2220 = vmatmul.bf16.gmra.mxu0 %v1598
        %v2221 = vpop.f32.mrf.mxu0
        %v2222 = vadd.f32 %v607, %v2221
        %v2223 = vpop.f32.mrf.mxu0
        %v2224 = vadd.f32 %v607, %v2223
        %2225 = vmatmul.bf16.gmra.mxu0 %v1601
        %v2226 = vpop.f32.mrf.mxu0
        %v2227 = vadd.f32 %v607, %v2226
        %v2228 = vpop.f32.mrf.mxu0
        %v2229 = vadd.f32 %v607, %v2228
        %2230 = vmatmul.bf16.gmra.mxu0 %v1604
        %v2231 = vpop.f32.mrf.mxu0
        %v2232 = vadd.f32 %v607, %v2231
        %v2233 = vpop.f32.mrf.mxu0
        %v2234 = vadd.f32 %v607, %v2233
        %2235 = vmatmul.bf16.gmra.mxu0 %v1607
        %v2236 = vpop.f32.mrf.mxu0
        %v2237 = vadd.f32 %v607, %v2236
        %v2238 = vpop.f32.mrf.mxu0
        %v2239 = vadd.f32 %v607, %v2238
        %2240 = vmatmul.bf16.gmra.mxu0 %v1610
        %v2241 = vpop.f32.mrf.mxu0
        %v2242 = vadd.f32 %v607, %v2241
        %v2243 = vpop.f32.mrf.mxu0
        %v2244 = vadd.f32 %v607, %v2243
        %2245 = vmatmul.bf16.gmra.mxu0 %v1613
        %v2246 = vpop.f32.mrf.mxu0
        %v2247 = vadd.f32 %v607, %v2246
        %v2248 = vpop.f32.mrf.mxu0
        %v2249 = vadd.f32 %v607, %v2248
        %2250 = vmatmul.bf16.gmra.mxu0 %v1616
        %v2251 = vpop.f32.mrf.mxu0
        %v2252 = vadd.f32 %v607, %v2251
        %v2253 = vpop.f32.mrf.mxu0
        %v2254 = vadd.f32 %v607, %v2253
        %2255 = vmatmul.bf16.gmra.mxu0 %v1619
        %v2256 = vpop.f32.mrf.mxu0
        %v2257 = vadd.f32 %v607, %v2256
        %v2258 = vpop.f32.mrf.mxu0
        %v2259 = vadd.f32 %v607, %v2258
        %2260 = vmatmul.bf16.gmra.mxu0 %v1622
        %v2261 = vpop.f32.mrf.mxu0
        %v2262 = vadd.f32 %v607, %v2261
        %v2263 = vpop.f32.mrf.mxu0
        %v2264 = vadd.f32 %v607, %v2263
        %2265 = vmatmul.bf16.gmra.mxu0 %v1625
        %v2266 = vpop.f32.mrf.mxu0
        %v2267 = vadd.f32 %v607, %v2266
        %v2268 = vpop.f32.mrf.mxu0
        %v2269 = vadd.f32 %v607, %v2268
        %2270 = vmatmul.bf16.gmra.mxu0 %v1628
        %v2271 = vpop.f32.mrf.mxu0
        %v2272 = vadd.f32 %v607, %v2271
        %v2273 = vpop.f32.mrf.mxu0
        %v2274 = vadd.f32 %v607, %v2273
        %2275 = vmatmul.bf16.gmra.mxu0 %v1631
        %v2276 = vpop.f32.mrf.mxu0
        %v2277 = vadd.f32 %v607, %v2276
        %v2278 = vpop.f32.mrf.mxu0
        %v2279 = vadd.f32 %v607, %v2278
        %2280 = vmatmul.bf16.gmra.mxu0 %v1634
        %v2281 = vpop.f32.mrf.mxu0
        %v2282 = vadd.f32 %v607, %v2281
        %v2283 = vpop.f32.mrf.mxu0
        %v2284 = vadd.f32 %v607, %v2283
        %2285 = vmatmul.bf16.gmra.mxu0 %v1637
        %v2286 = vpop.f32.mrf.mxu0
        %v2287 = vadd.f32 %v607, %v2286
        %v2288 = vpop.f32.mrf.mxu0
        %v2289 = vadd.f32 %v607, %v2288
        %2290 = vmatmul.bf16.gmra.mxu0 %v1640
        %v2291 = vpop.f32.mrf.mxu0
        %v2292 = vadd.f32 %v607, %v2291
        %v2293 = vpop.f32.mrf.mxu0
        %v2294 = vadd.f32 %v607, %v2293
        %2295 = vmatmul.bf16.gmra.mxu0 %v1643
        %v2296 = vpop.f32.mrf.mxu0
        %v2297 = vadd.f32 %v607, %v2296
        %v2298 = vpop.f32.mrf.mxu0
        %v2299 = vadd.f32 %v607, %v2298
        %2300 = vdwg.mxu0
        %v2301 = vmax.f32 %v1662, 0.0
        %v2302 = vmax.f32 %v1664, 0.0
        %v2303 = vmax.f32 %v1667, 0.0
        %v2304 = vmax.f32 %v1669, 0.0
        %v2305 = vmax.f32 %v1672, 0.0
        %v2306 = vmax.f32 %v1674, 0.0
        %v2307 = vmax.f32 %v1677, 0.0
        %v2308 = vmax.f32 %v1679, 0.0
        %v2309 = vmax.f32 %v1682, 0.0
        %v2310 = vmax.f32 %v1684, 0.0
        %v2311 = vmax.f32 %v1687, 0.0
        %v2312 = vmax.f32 %v1689, 0.0
        %v2313 = vmax.f32 %v1692, 0.0
        %v2314 = vmax.f32 %v1694, 0.0
        %v2315 = vmax.f32 %v1697, 0.0
        %v2316 = vmax.f32 %v1699, 0.0
        %v2317 = vmax.f32 %v1702, 0.0
        %v2318 = vmax.f32 %v1704, 0.0
        %v2319 = vmax.f32 %v1707, 0.0
        %v2320 = vmax.f32 %v1709, 0.0
        %v2321 = vmax.f32 %v1712, 0.0
        %v2322 = vmax.f32 %v1714, 0.0
        %v2323 = vmax.f32 %v1717, 0.0
        %v2324 = vmax.f32 %v1719, 0.0
        %v2325 = vmax.f32 %v1722, 0.0
        %v2326 = vmax.f32 %v1724, 0.0
        %v2327 = vmax.f32 %v1727, 0.0
        %v2328 = vmax.f32 %v1729, 0.0
        %v2329 = vmax.f32 %v1732, 0.0
        %v2330 = vmax.f32 %v1734, 0.0
        %v2331 = vmax.f32 %v1737, 0.0
        %v2332 = vmax.f32 %v1739, 0.0
        %v2333 = vmax.f32 %v1742, 0.0
        %v2334 = vmax.f32 %v1744, 0.0
        %v2335 = vmax.f32 %v1747, 0.0
        %v2336 = vmax.f32 %v1749, 0.0
        %v2337 = vmax.f32 %v1752, 0.0
        %v2338 = vmax.f32 %v1754, 0.0
        %v2339 = vmax.f32 %v1757, 0.0
        %v2340 = vmax.f32 %v1759, 0.0
        %v2341 = vmax.f32 %v1762, 0.0
        %v2342 = vmax.f32 %v1764, 0.0
        %v2343 = vmax.f32 %v1767, 0.0
        %v2344 = vmax.f32 %v1769, 0.0
        %v2345 = vmax.f32 %v1772, 0.0
        %v2346 = vmax.f32 %v1774, 0.0
        %v2347 = vmax.f32 %v1777, 0.0
        %v2348 = vmax.f32 %v1779, 0.0
        %v2349 = vmax.f32 %v1782, 0.0
        %v2350 = vmax.f32 %v1784, 0.0
        %v2351 = vmax.f32 %v1787, 0.0
        %v2352 = vmax.f32 %v1789, 0.0
        %v2353 = vmax.f32 %v1792, 0.0
        %v2354 = vmax.f32 %v1794, 0.0
        %v2355 = vmax.f32 %v1797, 0.0
        %v2356 = vmax.f32 %v1799, 0.0
        %v2357 = vmax.f32 %v1802, 0.0
        %v2358 = vmax.f32 %v1804, 0.0
        %v2359 = vmax.f32 %v1807, 0.0
        %v2360 = vmax.f32 %v1809, 0.0
        %v2361 = vmax.f32 %v1812, 0.0
        %v2362 = vmax.f32 %v1814, 0.0
        %v2363 = vmax.f32 %v1817, 0.0
        %v2364 = vmax.f32 %v1819, 0.0
        %v2365 = vmax.f32 %v1822, 0.0
        %v2366 = vmax.f32 %v1824, 0.0
        %v2367 = vmax.f32 %v1827, 0.0
        %v2368 = vmax.f32 %v1829, 0.0
        %v2369 = vmax.f32 %v1832, 0.0
        %v2370 = vmax.f32 %v1834, 0.0
        %v2371 = vmax.f32 %v1837, 0.0
        %v2372 = vmax.f32 %v1839, 0.0
        %v2373 = vmax.f32 %v1842, 0.0
        %v2374 = vmax.f32 %v1844, 0.0
        %v2375 = vmax.f32 %v1847, 0.0
        %v2376 = vmax.f32 %v1849, 0.0
        %v2377 = vmax.f32 %v1852, 0.0
        %v2378 = vmax.f32 %v1854, 0.0
        %v2379 = vmax.f32 %v1857, 0.0
        %v2380 = vmax.f32 %v1859, 0.0
        %v2381 = vmax.f32 %v1862, 0.0
        %v2382 = vmax.f32 %v1864, 0.0
        %v2383 = vmax.f32 %v1867, 0.0
        %v2384 = vmax.f32 %v1869, 0.0
        %v2385 = vmax.f32 %v1872, 0.0
        %v2386 = vmax.f32 %v1874, 0.0
        %v2387 = vmax.f32 %v1877, 0.0
        %v2388 = vmax.f32 %v1879, 0.0
        %v2389 = vmax.f32 %v1882, 0.0
        %v2390 = vmax.f32 %v1884, 0.0
        %v2391 = vmax.f32 %v1887, 0.0
        %v2392 = vmax.f32 %v1889, 0.0
        %v2393 = vmax.f32 %v1892, 0.0
        %v2394 = vmax.f32 %v1894, 0.0
        %v2395 = vmax.f32 %v1897, 0.0
        %v2396 = vmax.f32 %v1899, 0.0
        %v2397 = vmax.f32 %v1902, 0.0
        %v2398 = vmax.f32 %v1904, 0.0
        %v2399 = vmax.f32 %v1907, 0.0
        %v2400 = vmax.f32 %v1909, 0.0
        %v2401 = vmax.f32 %v1912, 0.0
        %v2402 = vmax.f32 %v1914, 0.0
        %v2403 = vmax.f32 %v1917, 0.0
        %v2404 = vmax.f32 %v1919, 0.0
        %v2405 = vmax.f32 %v1922, 0.0
        %v2406 = vmax.f32 %v1924, 0.0
        %v2407 = vmax.f32 %v1927, 0.0
        %v2408 = vmax.f32 %v1929, 0.0
        %v2409 = vmax.f32 %v1932, 0.0
        %v2410 = vmax.f32 %v1934, 0.0
        %v2411 = vmax.f32 %v1937, 0.0
        %v2412 = vmax.f32 %v1939, 0.0
        %v2413 = vmax.f32 %v1942, 0.0
        %v2414 = vmax.f32 %v1944, 0.0
        %v2415 = vmax.f32 %v1947, 0.0
        %v2416 = vmax.f32 %v1949, 0.0
        %v2417 = vmax.f32 %v1952, 0.0
        %v2418 = vmax.f32 %v1954, 0.0
        %v2419 = vmax.f32 %v1957, 0.0
        %v2420 = vmax.f32 %v1959, 0.0
        %v2421 = vmax.f32 %v1962, 0.0
        %v2422 = vmax.f32 %v1964, 0.0
        %v2423 = vmax.f32 %v1967, 0.0
        %v2424 = vmax.f32 %v1969, 0.0
        %v2425 = vmax.f32 %v1972, 0.0
        %v2426 = vmax.f32 %v1974, 0.0
        %v2427 = vmax.f32 %v1977, 0.0
        %v2428 = vmax.f32 %v1979, 0.0
        %v2429 = vmax.f32 %v1982, 0.0
        %v2430 = vmax.f32 %v1984, 0.0
        %v2431 = vmax.f32 %v1987, 0.0
        %v2432 = vmax.f32 %v1989, 0.0
        %v2433 = vmax.f32 %v1992, 0.0
        %v2434 = vmax.f32 %v1994, 0.0
        %v2435 = vmax.f32 %v1997, 0.0
        %v2436 = vmax.f32 %v1999, 0.0
        %v2437 = vmax.f32 %v2002, 0.0
        %v2438 = vmax.f32 %v2004, 0.0
        %v2439 = vmax.f32 %v2007, 0.0
        %v2440 = vmax.f32 %v2009, 0.0
        %v2441 = vmax.f32 %v2012, 0.0
        %v2442 = vmax.f32 %v2014, 0.0
        %v2443 = vmax.f32 %v2017, 0.0
        %v2444 = vmax.f32 %v2019, 0.0
        %v2445 = vmax.f32 %v2022, 0.0
        %v2446 = vmax.f32 %v2024, 0.0
        %v2447 = vmax.f32 %v2027, 0.0
        %v2448 = vmax.f32 %v2029, 0.0
        %v2449 = vmax.f32 %v2032, 0.0
        %v2450 = vmax.f32 %v2034, 0.0
        %v2451 = vmax.f32 %v2037, 0.0
        %v2452 = vmax.f32 %v2039, 0.0
        %v2453 = vmax.f32 %v2042, 0.0
        %v2454 = vmax.f32 %v2044, 0.0
        %v2455 = vmax.f32 %v2047, 0.0
        %v2456 = vmax.f32 %v2049, 0.0
        %v2457 = vmax.f32 %v2052, 0.0
        %v2458 = vmax.f32 %v2054, 0.0
        %v2459 = vmax.f32 %v2057, 0.0
        %v2460 = vmax.f32 %v2059, 0.0
        %v2461 = vmax.f32 %v2062, 0.0
        %v2462 = vmax.f32 %v2064, 0.0
        %v2463 = vmax.f32 %v2067, 0.0
        %v2464 = vmax.f32 %v2069, 0.0
        %v2465 = vmax.f32 %v2072, 0.0
        %v2466 = vmax.f32 %v2074, 0.0
        %v2467 = vmax.f32 %v2077, 0.0
        %v2468 = vmax.f32 %v2079, 0.0
        %v2469 = vmax.f32 %v2082, 0.0
        %v2470 = vmax.f32 %v2084, 0.0
        %v2471 = vmax.f32 %v2087, 0.0
        %v2472 = vmax.f32 %v2089, 0.0
        %v2473 = vmax.f32 %v2092, 0.0
        %v2474 = vmax.f32 %v2094, 0.0
        %v2475 = vmax.f32 %v2097, 0.0
        %v2476 = vmax.f32 %v2099, 0.0
        %v2477 = vmax.f32 %v2102, 0.0
        %v2478 = vmax.f32 %v2104, 0.0
        %v2479 = vmax.f32 %v2107, 0.0
        %v2480 = vmax.f32 %v2109, 0.0
        %v2481 = vmax.f32 %v2112, 0.0
        %v2482 = vmax.f32 %v2114, 0.0
        %v2483 = vmax.f32 %v2117, 0.0
        %v2484 = vmax.f32 %v2119, 0.0
        %v2485 = vmax.f32 %v2122, 0.0
        %v2486 = vmax.f32 %v2124, 0.0
        %v2487 = vmax.f32 %v2127, 0.0
        %v2488 = vmax.f32 %v2129, 0.0
        %v2489 = vmax.f32 %v2132, 0.0
        %v2490 = vmax.f32 %v2134, 0.0
        %v2491 = vmax.f32 %v2137, 0.0
        %v2492 = vmax.f32 %v2139, 0.0
        %v2493 = vmax.f32 %v2142, 0.0
        %v2494 = vmax.f32 %v2144, 0.0
        %v2495 = vmax.f32 %v2147, 0.0
        %v2496 = vmax.f32 %v2149, 0.0
        %v2497 = vmax.f32 %v2152, 0.0
        %v2498 = vmax.f32 %v2154, 0.0
        %v2499 = vmax.f32 %v2157, 0.0
        %v2500 = vmax.f32 %v2159, 0.0
        %v2501 = vmax.f32 %v2162, 0.0
        %v2502 = vmax.f32 %v2164, 0.0
        %v2503 = vmax.f32 %v2167, 0.0
        %v2504 = vmax.f32 %v2169, 0.0
        %v2505 = vmax.f32 %v2172, 0.0
        %v2506 = vmax.f32 %v2174, 0.0
        %v2507 = vmax.f32 %v2177, 0.0
        %v2508 = vmax.f32 %v2179, 0.0
        %v2509 = vmax.f32 %v2182, 0.0
        %v2510 = vmax.f32 %v2184, 0.0
        %v2511 = vmax.f32 %v2187, 0.0
        %v2512 = vmax.f32 %v2189, 0.0
        %v2513 = vmax.f32 %v2192, 0.0
        %v2514 = vmax.f32 %v2194, 0.0
        %v2515 = vmax.f32 %v2197, 0.0
        %v2516 = vmax.f32 %v2199, 0.0
        %v2517 = vmax.f32 %v2202, 0.0
        %v2518 = vmax.f32 %v2204, 0.0
        %v2519 = vmax.f32 %v2207, 0.0
        %v2520 = vmax.f32 %v2209, 0.0
        %v2521 = vmax.f32 %v2212, 0.0
        %v2522 = vmax.f32 %v2214, 0.0
        %v2523 = vmax.f32 %v2217, 0.0
        %v2524 = vmax.f32 %v2219, 0.0
        %v2525 = vmax.f32 %v2222, 0.0
        %v2526 = vmax.f32 %v2224, 0.0
        %v2527 = vmax.f32 %v2227, 0.0
        %v2528 = vmax.f32 %v2229, 0.0
        %v2529 = vmax.f32 %v2232, 0.0
        %v2530 = vmax.f32 %v2234, 0.0
        %v2531 = vmax.f32 %v2237, 0.0
        %v2532 = vmax.f32 %v2239, 0.0
        %v2533 = vmax.f32 %v2242, 0.0
        %v2534 = vmax.f32 %v2244, 0.0
        %v2535 = vmax.f32 %v2247, 0.0
        %v2536 = vmax.f32 %v2249, 0.0
        %v2537 = vmax.f32 %v2252, 0.0
        %v2538 = vmax.f32 %v2254, 0.0
        %v2539 = vmax.f32 %v2257, 0.0
        %v2540 = vmax.f32 %v2259, 0.0
        %v2541 = vmax.f32 %v2262, 0.0
        %v2542 = vmax.f32 %v2264, 0.0
        %v2543 = vmax.f32 %v2267, 0.0
        %v2544 = vmax.f32 %v2269, 0.0
        %v2545 = vmax.f32 %v2272, 0.0
        %v2546 = vmax.f32 %v2274, 0.0
        %v2547 = vmax.f32 %v2277, 0.0
        %v2548 = vmax.f32 %v2279, 0.0
        %v2549 = vmax.f32 %v2282, 0.0
        %v2550 = vmax.f32 %v2284, 0.0
        %v2551 = vmax.f32 %v2287, 0.0
        %v2552 = vmax.f32 %v2289, 0.0
        %v2553 = vmax.f32 %v2292, 0.0
        %v2554 = vmax.f32 %v2294, 0.0
        %v2555 = vmax.f32 %v2297, 0.0
        %v2556 = vmax.f32 %v2299, 0.0
        %v2557 = vld [vmem:[%s3] sm:$0xff]
        %v2558 = vld [vmem:[%s3 + $0x8] sm:$0xff]
        %v2559 = vld [vmem:[%s3 + $0x10] sm:$0xff]
        %v2560 = vld [vmem:[%s3 + $0x18] sm:$0xff]
        %v2561 = vld [vmem:[%s3 + $0x20] sm:$0xff]
        %v2562 = vld [vmem:[%s3 + $0x28] sm:$0xff]
        %v2563 = vld [vmem:[%s3 + $0x30] sm:$0xff]
        %v2564 = vld [vmem:[%s3 + $0x38] sm:$0xff]
        %v2565 = vpack.c.bf16 %v2302, %v2301
        %v2566 = vpack.c.bf16 %v2304, %v2303
        %v2567 = vpack.c.bf16 %v2306, %v2305
        %v2568 = vpack.c.bf16 %v2308, %v2307
        %v2569 = vpack.c.bf16 %v2310, %v2309
        %v2570 = vpack.c.bf16 %v2312, %v2311
        %v2571 = vpack.c.bf16 %v2314, %v2313
        %v2572 = vpack.c.bf16 %v2316, %v2315
        %v2573 = vpack.c.bf16 %v2318, %v2317
        %v2574 = vpack.c.bf16 %v2320, %v2319
        %v2575 = vpack.c.bf16 %v2322, %v2321
        %v2576 = vpack.c.bf16 %v2324, %v2323
        %v2577 = vpack.c.bf16 %v2326, %v2325
        %v2578 = vpack.c.bf16 %v2328, %v2327
        %v2579 = vpack.c.bf16 %v2330, %v2329
        %v2580 = vpack.c.bf16 %v2332, %v2331
        %v2581 = vpack.c.bf16 %v2334, %v2333
        %v2582 = vpack.c.bf16 %v2336, %v2335
        %v2583 = vpack.c.bf16 %v2338, %v2337
        %v2584 = vpack.c.bf16 %v2340, %v2339
        %v2585 = vpack.c.bf16 %v2342, %v2341
        %v2586 = vpack.c.bf16 %v2344, %v2343
        %v2587 = vpack.c.bf16 %v2346, %v2345
        %v2588 = vpack.c.bf16 %v2348, %v2347
        %v2589 = vpack.c.bf16 %v2350, %v2349
        %v2590 = vpack.c.bf16 %v2352, %v2351
        %v2591 = vpack.c.bf16 %v2354, %v2353
        %v2592 = vpack.c.bf16 %v2356, %v2355
        %v2593 = vpack.c.bf16 %v2358, %v2357
        %v2594 = vpack.c.bf16 %v2360, %v2359
        %v2595 = vpack.c.bf16 %v2362, %v2361
        %v2596 = vpack.c.bf16 %v2364, %v2363
        %v2597 = vpack.c.bf16 %v2366, %v2365
        %v2598 = vpack.c.bf16 %v2368, %v2367
        %v2599 = vpack.c.bf16 %v2370, %v2369
        %v2600 = vpack.c.bf16 %v2372, %v2371
        %v2601 = vpack.c.bf16 %v2374, %v2373
        %v2602 = vpack.c.bf16 %v2376, %v2375
        %v2603 = vpack.c.bf16 %v2378, %v2377
        %v2604 = vpack.c.bf16 %v2380, %v2379
        %v2605 = vpack.c.bf16 %v2382, %v2381
        %v2606 = vpack.c.bf16 %v2384, %v2383
        %v2607 = vpack.c.bf16 %v2386, %v2385
        %v2608 = vpack.c.bf16 %v2388, %v2387
        %v2609 = vpack.c.bf16 %v2390, %v2389
        %v2610 = vpack.c.bf16 %v2392, %v2391
        %v2611 = vpack.c.bf16 %v2394, %v2393
        %v2612 = vpack.c.bf16 %v2396, %v2395
        %v2613 = vpack.c.bf16 %v2398, %v2397
        %v2614 = vpack.c.bf16 %v2400, %v2399
        %v2615 = vpack.c.bf16 %v2402, %v2401
        %v2616 = vpack.c.bf16 %v2404, %v2403
        %v2617 = vpack.c.bf16 %v2406, %v2405
        %v2618 = vpack.c.bf16 %v2408, %v2407
        %v2619 = vpack.c.bf16 %v2410, %v2409
        %v2620 = vpack.c.bf16 %v2412, %v2411
        %v2621 = vpack.c.bf16 %v2414, %v2413
        %v2622 = vpack.c.bf16 %v2416, %v2415
        %v2623 = vpack.c.bf16 %v2418, %v2417
        %v2624 = vpack.c.bf16 %v2420, %v2419
        %v2625 = vpack.c.bf16 %v2422, %v2421
        %v2626 = vpack.c.bf16 %v2424, %v2423
        %v2627 = vpack.c.bf16 %v2426, %v2425
        %v2628 = vpack.c.bf16 %v2428, %v2427
        %v2629 = vpack.c.bf16 %v2430, %v2429
        %v2630 = vpack.c.bf16 %v2432, %v2431
        %v2631 = vpack.c.bf16 %v2434, %v2433
        %v2632 = vpack.c.bf16 %v2436, %v2435
        %v2633 = vpack.c.bf16 %v2438, %v2437
        %v2634 = vpack.c.bf16 %v2440, %v2439
        %v2635 = vpack.c.bf16 %v2442, %v2441
        %v2636 = vpack.c.bf16 %v2444, %v2443
        %v2637 = vpack.c.bf16 %v2446, %v2445
        %v2638 = vpack.c.bf16 %v2448, %v2447
        %v2639 = vpack.c.bf16 %v2450, %v2449
        %v2640 = vpack.c.bf16 %v2452, %v2451
        %v2641 = vpack.c.bf16 %v2454, %v2453
        %v2642 = vpack.c.bf16 %v2456, %v2455
        %v2643 = vpack.c.bf16 %v2458, %v2457
        %v2644 = vpack.c.bf16 %v2460, %v2459
        %v2645 = vpack.c.bf16 %v2462, %v2461
        %v2646 = vpack.c.bf16 %v2464, %v2463
        %v2647 = vpack.c.bf16 %v2466, %v2465
        %v2648 = vpack.c.bf16 %v2468, %v2467
        %v2649 = vpack.c.bf16 %v2470, %v2469
        %v2650 = vpack.c.bf16 %v2472, %v2471
        %v2651 = vpack.c.bf16 %v2474, %v2473
        %v2652 = vpack.c.bf16 %v2476, %v2475
        %v2653 = vpack.c.bf16 %v2478, %v2477
        %v2654 = vpack.c.bf16 %v2480, %v2479
        %v2655 = vpack.c.bf16 %v2482, %v2481
        %v2656 = vpack.c.bf16 %v2484, %v2483
        %v2657 = vpack.c.bf16 %v2486, %v2485
        %v2658 = vpack.c.bf16 %v2488, %v2487
        %v2659 = vpack.c.bf16 %v2490, %v2489
        %v2660 = vpack.c.bf16 %v2492, %v2491
        %v2661 = vpack.c.bf16 %v2494, %v2493
        %v2662 = vpack.c.bf16 %v2496, %v2495
        %v2663 = vpack.c.bf16 %v2498, %v2497
        %v2664 = vpack.c.bf16 %v2500, %v2499
        %v2665 = vpack.c.bf16 %v2502, %v2501
        %v2666 = vpack.c.bf16 %v2504, %v2503
        %v2667 = vpack.c.bf16 %v2506, %v2505
        %v2668 = vpack.c.bf16 %v2508, %v2507
        %v2669 = vpack.c.bf16 %v2510, %v2509
        %v2670 = vpack.c.bf16 %v2512, %v2511
        %v2671 = vpack.c.bf16 %v2514, %v2513
        %v2672 = vpack.c.bf16 %v2516, %v2515
        %v2673 = vpack.c.bf16 %v2518, %v2517
        %v2674 = vpack.c.bf16 %v2520, %v2519
        %v2675 = vpack.c.bf16 %v2522, %v2521
        %v2676 = vpack.c.bf16 %v2524, %v2523
        %v2677 = vpack.c.bf16 %v2526, %v2525
        %v2678 = vpack.c.bf16 %v2528, %v2527
        %v2679 = vpack.c.bf16 %v2530, %v2529
        %v2680 = vpack.c.bf16 %v2532, %v2531
        %v2681 = vpack.c.bf16 %v2534, %v2533
        %v2682 = vpack.c.bf16 %v2536, %v2535
        %v2683 = vpack.c.bf16 %v2538, %v2537
        %v2684 = vpack.c.bf16 %v2540, %v2539
        %v2685 = vpack.c.bf16 %v2542, %v2541
        %v2686 = vpack.c.bf16 %v2544, %v2543
        %v2687 = vpack.c.bf16 %v2546, %v2545
        %v2688 = vpack.c.bf16 %v2548, %v2547
        %v2689 = vpack.c.bf16 %v2550, %v2549
        %v2690 = vpack.c.bf16 %v2552, %v2551
        %v2691 = vpack.c.bf16 %v2554, %v2553
        %v2692 = vpack.c.bf16 %v2556, %v2555
        %v2701 = vunpack.c.l.b16 %v2557
        %v2702 = vunpack.c.h.b16 %v2557
        %v2703 = vunpack.c.l.b16 %v2558
        %v2704 = vunpack.c.h.b16 %v2558
        %v2705 = vunpack.c.l.b16 %v2559
        %v2706 = vunpack.c.h.b16 %v2559
        %v2707 = vunpack.c.l.b16 %v2560
        %v2708 = vunpack.c.h.b16 %v2560
        %v2709 = vunpack.c.l.b16 %v2561
        %v2710 = vunpack.c.h.b16 %v2561
        %v2711 = vunpack.c.l.b16 %v2562
        %v2712 = vunpack.c.h.b16 %v2562
        %v2713 = vunpack.c.l.b16 %v2563
        %v2714 = vunpack.c.h.b16 %v2563
        %v2715 = vunpack.c.l.b16 %v2564
        %v2716 = vunpack.c.h.b16 %v2564
        %v2717 = vpack.c.b16 %v2701, %v2701
        %v2718 = vpack.c.b16 %v2702, %v2702
        %v2719 = vpack.c.b16 %v2703, %v2703
        %v2720 = vpack.c.b16 %v2704, %v2704
        %v2721 = vpack.c.b16 %v2705, %v2705
        %v2722 = vpack.c.b16 %v2706, %v2706
        %v2723 = vpack.c.b16 %v2707, %v2707
        %v2724 = vpack.c.b16 %v2708, %v2708
        %v2725 = vpack.c.b16 %v2709, %v2709
        %v2726 = vpack.c.b16 %v2710, %v2710
        %v2727 = vpack.c.b16 %v2711, %v2711
        %v2728 = vpack.c.b16 %v2712, %v2712
        %v2729 = vpack.c.b16 %v2713, %v2713
        %v2730 = vpack.c.b16 %v2714, %v2714
        %v2731 = vpack.c.b16 %v2715, %v2715
        %v2732 = vpack.c.b16 %v2716, %v2716
        %2749 = vmatpush.bf16.msra.mxu0 %v2572
        %2750 = vmatpush.bf16.msra.mxu0 %v2571
        %2751 = vmatpush.bf16.msra.mxu0 %v2570
        %2752 = vmatpush.bf16.msra.mxu0 %v2569
        %2753 = vmatpush.bf16.msra.mxu0 %v2568
        %2754 = vmatpush.bf16.msra.mxu0 %v2567
        %2755 = vmatpush.bf16.msra.mxu0 %v2566
        %2756 = vmatpush.bf16.msra.mxu0 %v2565
        %2757 = vmatmul.bf16.gmra.mxu0 %v2717
        %v2758 = vpop.f32.mrf.mxu0
        %v2759 = vadd.f32 0.0, %v2758
        %v2760 = vpop.f32.mrf.mxu0
        %2761 = vdwg.mxu0
        %2762 = vmatpush.bf16.msra.mxu0 %v2580
        %2763 = vmatpush.bf16.msra.mxu0 %v2579
        %2764 = vmatpush.bf16.msra.mxu0 %v2578
        %2765 = vmatpush.bf16.msra.mxu0 %v2577
        %2766 = vmatpush.bf16.msra.mxu0 %v2576
        %2767 = vmatpush.bf16.msra.mxu0 %v2575
        %2768 = vmatpush.bf16.msra.mxu0 %v2574
        %2769 = vmatpush.bf16.msra.mxu0 %v2573
        %2770 = vmatmul.bf16.gmra.mxu0 %v2718
        %v2771 = vpop.f32.mrf.mxu0
        %v2772 = vadd.f32 %v2759, %v2771
        %v2773 = vpop.f32.mrf.mxu0
        %2774 = vdwg.mxu0
        %2775 = vmatpush.bf16.msra.mxu0 %v2588
        %2776 = vmatpush.bf16.msra.mxu0 %v2587
        %2777 = vmatpush.bf16.msra.mxu0 %v2586
        %2778 = vmatpush.bf16.msra.mxu0 %v2585
        %2779 = vmatpush.bf16.msra.mxu0 %v2584
        %2780 = vmatpush.bf16.msra.mxu0 %v2583
        %2781 = vmatpush.bf16.msra.mxu0 %v2582
        %2782 = vmatpush.bf16.msra.mxu0 %v2581
        %2783 = vmatmul.bf16.gmra.mxu0 %v2719
        %v2784 = vpop.f32.mrf.mxu0
        %v2785 = vadd.f32 %v2772, %v2784
        %v2786 = vpop.f32.mrf.mxu0
        %2787 = vdwg.mxu0
        %2788 = vmatpush.bf16.msra.mxu0 %v2596
        %2789 = vmatpush.bf16.msra.mxu0 %v2595
        %2790 = vmatpush.bf16.msra.mxu0 %v2594
        %2791 = vmatpush.bf16.msra.mxu0 %v2593
        %2792 = vmatpush.bf16.msra.mxu0 %v2592
        %2793 = vmatpush.bf16.msra.mxu0 %v2591
        %2794 = vmatpush.bf16.msra.mxu0 %v2590
        %2795 = vmatpush.bf16.msra.mxu0 %v2589
        %2796 = vmatmul.bf16.gmra.mxu0 %v2720
        %v2797 = vpop.f32.mrf.mxu0
        %v2798 = vadd.f32 %v2785, %v2797
        %v2799 = vpop.f32.mrf.mxu0
        %2800 = vdwg.mxu0
        %2801 = vmatpush.bf16.msra.mxu0 %v2604
        %2802 = vmatpush.bf16.msra.mxu0 %v2603
        %2803 = vmatpush.bf16.msra.mxu0 %v2602
        %2804 = vmatpush.bf16.msra.mxu0 %v2601
        %2805 = vmatpush.bf16.msra.mxu0 %v2600
        %2806 = vmatpush.bf16.msra.mxu0 %v2599
        %2807 = vmatpush.bf16.msra.mxu0 %v2598
        %2808 = vmatpush.bf16.msra.mxu0 %v2597
        %2809 = vmatmul.bf16.gmra.mxu0 %v2721
        %v2810 = vpop.f32.mrf.mxu0
        %v2811 = vadd.f32 %v2798, %v2810
        %v2812 = vpop.f32.mrf.mxu0
        %2813 = vdwg.mxu0
        %2814 = vmatpush.bf16.msra.mxu0 %v2612
        %2815 = vmatpush.bf16.msra.mxu0 %v2611
        %2816 = vmatpush.bf16.msra.mxu0 %v2610
        %2817 = vmatpush.bf16.msra.mxu0 %v2609
        %2818 = vmatpush.bf16.msra.mxu0 %v2608
        %2819 = vmatpush.bf16.msra.mxu0 %v2607
        %2820 = vmatpush.bf16.msra.mxu0 %v2606
        %2821 = vmatpush.bf16.msra.mxu0 %v2605
        %2822 = vmatmul.bf16.gmra.mxu0 %v2722
        %v2823 = vpop.f32.mrf.mxu0
        %v2824 = vadd.f32 %v2811, %v2823
        %v2825 = vpop.f32.mrf.mxu0
        %2826 = vdwg.mxu0
        %2827 = vmatpush.bf16.msra.mxu0 %v2620
        %2828 = vmatpush.bf16.msra.mxu0 %v2619
        %2829 = vmatpush.bf16.msra.mxu0 %v2618
        %2830 = vmatpush.bf16.msra.mxu0 %v2617
        %2831 = vmatpush.bf16.msra.mxu0 %v2616
        %2832 = vmatpush.bf16.msra.mxu0 %v2615
        %2833 = vmatpush.bf16.msra.mxu0 %v2614
        %2834 = vmatpush.bf16.msra.mxu0 %v2613
        %2835 = vmatmul.bf16.gmra.mxu0 %v2723
        %v2836 = vpop.f32.mrf.mxu0
        %v2837 = vadd.f32 %v2824, %v2836
        %v2838 = vpop.f32.mrf.mxu0
        %2839 = vdwg.mxu0
        %2840 = vmatpush.bf16.msra.mxu0 %v2628
        %2841 = vmatpush.bf16.msra.mxu0 %v2627
        %2842 = vmatpush.bf16.msra.mxu0 %v2626
        %2843 = vmatpush.bf16.msra.mxu0 %v2625
        %2844 = vmatpush.bf16.msra.mxu0 %v2624
        %2845 = vmatpush.bf16.msra.mxu0 %v2623
        %2846 = vmatpush.bf16.msra.mxu0 %v2622
        %2847 = vmatpush.bf16.msra.mxu0 %v2621
        %2848 = vmatmul.bf16.gmra.mxu0 %v2724
        %v2849 = vpop.f32.mrf.mxu0
        %v2850 = vadd.f32 %v2837, %v2849
        %v2851 = vpop.f32.mrf.mxu0
        %2852 = vdwg.mxu0
        %2853 = vmatpush.bf16.msra.mxu0 %v2636
        %2854 = vmatpush.bf16.msra.mxu0 %v2635
        %2855 = vmatpush.bf16.msra.mxu0 %v2634
        %2856 = vmatpush.bf16.msra.mxu0 %v2633
        %2857 = vmatpush.bf16.msra.mxu0 %v2632
        %2858 = vmatpush.bf16.msra.mxu0 %v2631
        %2859 = vmatpush.bf16.msra.mxu0 %v2630
        %2860 = vmatpush.bf16.msra.mxu0 %v2629
        %2861 = vmatmul.bf16.gmra.mxu0 %v2725
        %v2862 = vpop.f32.mrf.mxu0
        %v2863 = vadd.f32 %v2850, %v2862
        %v2864 = vpop.f32.mrf.mxu0
        %2865 = vdwg.mxu0
        %2866 = vmatpush.bf16.msra.mxu0 %v2644
        %2867 = vmatpush.bf16.msra.mxu0 %v2643
        %2868 = vmatpush.bf16.msra.mxu0 %v2642
        %2869 = vmatpush.bf16.msra.mxu0 %v2641
        %2870 = vmatpush.bf16.msra.mxu0 %v2640
        %2871 = vmatpush.bf16.msra.mxu0 %v2639
        %2872 = vmatpush.bf16.msra.mxu0 %v2638
        %2873 = vmatpush.bf16.msra.mxu0 %v2637
        %2874 = vmatmul.bf16.gmra.mxu0 %v2726
        %v2875 = vpop.f32.mrf.mxu0
        %v2876 = vadd.f32 %v2863, %v2875
        %v2877 = vpop.f32.mrf.mxu0
        %2878 = vdwg.mxu0
        %2879 = vmatpush.bf16.msra.mxu0 %v2652
        %2880 = vmatpush.bf16.msra.mxu0 %v2651
        %2881 = vmatpush.bf16.msra.mxu0 %v2650
        %2882 = vmatpush.bf16.msra.mxu0 %v2649
        %2883 = vmatpush.bf16.msra.mxu0 %v2648
        %2884 = vmatpush.bf16.msra.mxu0 %v2647
        %2885 = vmatpush.bf16.msra.mxu0 %v2646
        %2886 = vmatpush.bf16.msra.mxu0 %v2645
        %2887 = vmatmul.bf16.gmra.mxu0 %v2727
        %v2888 = vpop.f32.mrf.mxu0
        %v2889 = vadd.f32 %v2876, %v2888
        %v2890 = vpop.f32.mrf.mxu0
        %2891 = vdwg.mxu0
        %2892 = vmatpush.bf16.msra.mxu0 %v2660
        %2893 = vmatpush.bf16.msra.mxu0 %v2659
        %2894 = vmatpush.bf16.msra.mxu0 %v2658
        %2895 = vmatpush.bf16.msra.mxu0 %v2657
        %2896 = vmatpush.bf16.msra.mxu0 %v2656
        %2897 = vmatpush.bf16.msra.mxu0 %v2655
        %2898 = vmatpush.bf16.msra.mxu0 %v2654
        %2899 = vmatpush.bf16.msra.mxu0 %v2653
        %2900 = vmatmul.bf16.gmra.mxu0 %v2728
        %v2901 = vpop.f32.mrf.mxu0
        %v2902 = vadd.f32 %v2889, %v2901
        %v2903 = vpop.f32.mrf.mxu0
        %2904 = vdwg.mxu0
        %2905 = vmatpush.bf16.msra.mxu0 %v2668
        %2906 = vmatpush.bf16.msra.mxu0 %v2667
        %2907 = vmatpush.bf16.msra.mxu0 %v2666
        %2908 = vmatpush.bf16.msra.mxu0 %v2665
        %2909 = vmatpush.bf16.msra.mxu0 %v2664
        %2910 = vmatpush.bf16.msra.mxu0 %v2663
        %2911 = vmatpush.bf16.msra.mxu0 %v2662
        %2912 = vmatpush.bf16.msra.mxu0 %v2661
        %2913 = vmatmul.bf16.gmra.mxu0 %v2729
        %v2914 = vpop.f32.mrf.mxu0
        %v2915 = vadd.f32 %v2902, %v2914
        %v2916 = vpop.f32.mrf.mxu0
        %2917 = vdwg.mxu0
        %2918 = vmatpush.bf16.msra.mxu0 %v2676
        %2919 = vmatpush.bf16.msra.mxu0 %v2675
        %2920 = vmatpush.bf16.msra.mxu0 %v2674
        %2921 = vmatpush.bf16.msra.mxu0 %v2673
        %2922 = vmatpush.bf16.msra.mxu0 %v2672
        %2923 = vmatpush.bf16.msra.mxu0 %v2671
        %2924 = vmatpush.bf16.msra.mxu0 %v2670
        %2925 = vmatpush.bf16.msra.mxu0 %v2669
        %2926 = vmatmul.bf16.gmra.mxu0 %v2730
        %v2927 = vpop.f32.mrf.mxu0
        %v2928 = vadd.f32 %v2915, %v2927
        %v2929 = vpop.f32.mrf.mxu0
        %2930 = vdwg.mxu0
        %2931 = vmatpush.bf16.msra.mxu0 %v2684
        %2932 = vmatpush.bf16.msra.mxu0 %v2683
        %2933 = vmatpush.bf16.msra.mxu0 %v2682
        %2934 = vmatpush.bf16.msra.mxu0 %v2681
        %2935 = vmatpush.bf16.msra.mxu0 %v2680
        %2936 = vmatpush.bf16.msra.mxu0 %v2679
        %2937 = vmatpush.bf16.msra.mxu0 %v2678
        %2938 = vmatpush.bf16.msra.mxu0 %v2677
        %2939 = vmatmul.bf16.gmra.mxu0 %v2731
        %v2940 = vpop.f32.mrf.mxu0
        %v2941 = vadd.f32 %v2928, %v2940
        %v2942 = vpop.f32.mrf.mxu0
        %2943 = vdwg.mxu0
        %2944 = vmatpush.bf16.msra.mxu0 %v2692
        %2945 = vmatpush.bf16.msra.mxu0 %v2691
        %2946 = vmatpush.bf16.msra.mxu0 %v2690
        %2947 = vmatpush.bf16.msra.mxu0 %v2689
        %2948 = vmatpush.bf16.msra.mxu0 %v2688
        %2949 = vmatpush.bf16.msra.mxu0 %v2687
        %2950 = vmatpush.bf16.msra.mxu0 %v2686
        %2951 = vmatpush.bf16.msra.mxu0 %v2685
        %2952 = vmatmul.bf16.gmra.mxu0 %v2732
        %v2953 = vpop.f32.mrf.mxu0
        %v2954 = vadd.f32 %v2941, %v2953
        %v2955 = vpop.f32.mrf.mxu0
        %2956 = vdwg.mxu0
        %2957 = vst [vmem:[%s330] sm:$0xff] %v2954
        %v2958 = vpack.c.bf16 %v2954, %v2954
        %v2959 = vld [vmem:[%s4] sm:$0xff]
        %v2960 = vld [vmem:[%s4 + $0x8] sm:$0xff]
        %v2961 = vld [vmem:[%s4 + $0x10] sm:$0xff]
        %v2962 = vld [vmem:[%s4 + $0x18] sm:$0xff]
        %v2963 = vld [vmem:[%s4 + $0x20] sm:$0xff]
        %v2964 = vld [vmem:[%s4 + $0x28] sm:$0xff]
        %v2965 = vld [vmem:[%s4 + $0x30] sm:$0xff]
        %v2966 = vld [vmem:[%s4 + $0x38] sm:$0xff]
        %v2967 = vld [vmem:[%s4 + $0x40] sm:$0xff]
        %v2968 = vld [vmem:[%s4 + $0x48] sm:$0xff]
        %v2969 = vld [vmem:[%s4 + $0x50] sm:$0xff]
        %v2970 = vld [vmem:[%s4 + $0x58] sm:$0xff]
        %v2971 = vld [vmem:[%s4 + $0x60] sm:$0xff]
        %v2972 = vld [vmem:[%s4 + $0x68] sm:$0xff]
        %v2973 = vld [vmem:[%s4 + $0x70] sm:$0xff]
        %v2974 = vld [vmem:[%s4 + $0x78] sm:$0xff]
        %v2975 = vld [vmem:[%s4 + $0x80] sm:$0xff]
        %v2976 = vld [vmem:[%s4 + $0x88] sm:$0xff]
        %v2977 = vld [vmem:[%s4 + $0x90] sm:$0xff]
        %v2978 = vld [vmem:[%s4 + $0x98] sm:$0xff]
        %v2979 = vld [vmem:[%s4 + $0xa0] sm:$0xff]
        %v2980 = vld [vmem:[%s4 + $0xa8] sm:$0xff]
        %v2981 = vld [vmem:[%s4 + $0xb0] sm:$0xff]
        %v2982 = vld [vmem:[%s4 + $0xb8] sm:$0xff]
        %v2983 = vld [vmem:[%s4 + $0xc0] sm:$0xff]
        %v2984 = vld [vmem:[%s4 + $0xc8] sm:$0xff]
        %v2985 = vld [vmem:[%s4 + $0xd0] sm:$0xff]
        %v2986 = vld [vmem:[%s4 + $0xd8] sm:$0xff]
        %v2987 = vld [vmem:[%s4 + $0xe0] sm:$0xff]
        %v2988 = vld [vmem:[%s4 + $0xe8] sm:$0xff]
        %v2989 = vld [vmem:[%s4 + $0xf0] sm:$0xff]
        %v2990 = vld [vmem:[%s4 + $0xf8] sm:$0xff]
        %v2991 = vld [vmem:[%s5] sm:$0xf]
        %v2993 = vperm.slane %v2991, 0
        %v2994 = vperm.slane %v2991, 1
        %v2995 = vperm.slane %v2991, 2
        %v2996 = vperm.slane %v2991, 3
        %v3033 = vunpack.c.l.b16 %v2959
        %v3034 = vunpack.c.h.b16 %v2959
        %v3035 = vunpack.c.l.b16 %v2960
        %v3036 = vunpack.c.h.b16 %v2960
        %v3037 = vunpack.c.l.b16 %v2961
        %v3038 = vunpack.c.h.b16 %v2961
        %v3039 = vunpack.c.l.b16 %v2962
        %v3040 = vunpack.c.h.b16 %v2962
        %v3041 = vunpack.c.l.b16 %v2963
        %v3042 = vunpack.c.h.b16 %v2963
        %v3043 = vunpack.c.l.b16 %v2964
        %v3044 = vunpack.c.h.b16 %v2964
        %v3045 = vunpack.c.l.b16 %v2965
        %v3046 = vunpack.c.h.b16 %v2965
        %v3047 = vunpack.c.l.b16 %v2966
        %v3048 = vunpack.c.h.b16 %v2966
        %v3049 = vunpack.c.l.b16 %v2967
        %v3050 = vunpack.c.h.b16 %v2967
        %v3051 = vunpack.c.l.b16 %v2968
        %v3052 = vunpack.c.h.b16 %v2968
        %v3053 = vunpack.c.l.b16 %v2969
        %v3054 = vunpack.c.h.b16 %v2969
        %v3055 = vunpack.c.l.b16 %v2970
        %v3056 = vunpack.c.h.b16 %v2970
        %v3057 = vunpack.c.l.b16 %v2971
        %v3058 = vunpack.c.h.b16 %v2971
        %v3059 = vunpack.c.l.b16 %v2972
        %v3060 = vunpack.c.h.b16 %v2972
        %v3061 = vunpack.c.l.b16 %v2973
        %v3062 = vunpack.c.h.b16 %v2973
        %v3063 = vunpack.c.l.b16 %v2974
        %v3064 = vunpack.c.h.b16 %v2974
        %v3065 = vunpack.c.l.b16 %v2975
        %v3066 = vunpack.c.h.b16 %v2975
        %v3067 = vunpack.c.l.b16 %v2976
        %v3068 = vunpack.c.h.b16 %v2976
        %v3069 = vunpack.c.l.b16 %v2977
        %v3070 = vunpack.c.h.b16 %v2977
        %v3071 = vunpack.c.l.b16 %v2978
        %v3072 = vunpack.c.h.b16 %v2978
        %v3073 = vunpack.c.l.b16 %v2979
        %v3074 = vunpack.c.h.b16 %v2979
        %v3075 = vunpack.c.l.b16 %v2980
        %v3076 = vunpack.c.h.b16 %v2980
        %v3077 = vunpack.c.l.b16 %v2981
        %v3078 = vunpack.c.h.b16 %v2981
        %v3079 = vunpack.c.l.b16 %v2982
        %v3080 = vunpack.c.h.b16 %v2982
        %v3081 = vunpack.c.l.b16 %v2983
        %v3082 = vunpack.c.h.b16 %v2983
        %v3083 = vunpack.c.l.b16 %v2984
        %v3084 = vunpack.c.h.b16 %v2984
        %v3085 = vunpack.c.l.b16 %v2985
        %v3086 = vunpack.c.h.b16 %v2985
        %v3087 = vunpack.c.l.b16 %v2986
        %v3088 = vunpack.c.h.b16 %v2986
        %v3089 = vunpack.c.l.b16 %v2987
        %v3090 = vunpack.c.h.b16 %v2987
        %v3091 = vunpack.c.l.b16 %v2988
        %v3092 = vunpack.c.h.b16 %v2988
        %v3093 = vunpack.c.l.b16 %v2989
        %v3094 = vunpack.c.h.b16 %v2989
        %v3095 = vunpack.c.l.b16 %v2990
        %v3096 = vunpack.c.h.b16 %v2990
        %v3097 = vpack.c.b16 %v3037, %v3033
        %v3098 = vpack.c.b16 %v3038, %v3034
        %v3099 = vpack.c.b16 %v3039, %v3035
        %v3100 = vpack.c.b16 %v3040, %v3036
        %v3101 = vpack.c.b16 %v3045, %v3041
        %v3102 = vpack.c.b16 %v3046, %v3042
        %v3103 = vpack.c.b16 %v3047, %v3043
        %v3104 = vpack.c.b16 %v3048, %v3044
        %v3105 = vpack.c.b16 %v3053, %v3049
        %v3106 = vpack.c.b16 %v3054, %v3050
        %v3107 = vpack.c.b16 %v3055, %v3051
        %v3108 = vpack.c.b16 %v3056, %v3052
        %v3109 = vpack.c.b16 %v3061, %v3057
        %v3110 = vpack.c.b16 %v3062, %v3058
        %v3111 = vpack.c.b16 %v3063, %v3059
        %v3112 = vpack.c.b16 %v3064, %v3060
        %v3113 = vpack.c.b16 %v3069, %v3065
        %v3114 = vpack.c.b16 %v3070, %v3066
        %v3115 = vpack.c.b16 %v3071, %v3067
        %v3116 = vpack.c.b16 %v3072, %v3068
        %v3117 = vpack.c.b16 %v3077, %v3073
        %v3118 = vpack.c.b16 %v3078, %v3074
        %v3119 = vpack.c.b16 %v3079, %v3075
        %v3120 = vpack.c.b16 %v3080, %v3076
        %v3121 = vpack.c.b16 %v3085, %v3081
        %v3122 = vpack.c.b16 %v3086, %v3082
        %v3123 = vpack.c.b16 %v3087, %v3083
        %v3124 = vpack.c.b16 %v3088, %v3084
        %v3125 = vpack.c.b16 %v3093, %v3089
        %v3126 = vpack.c.b16 %v3094, %v3090
        %v3127 = vpack.c.b16 %v3095, %v3091
        %v3128 = vpack.c.b16 %v3096, %v3092
        %3161 = vmatpush.bf16.msra.mxu0 %v3125
        %3162 = vmatpush.bf16.msra.mxu0 %v3121
        %3163 = vmatpush.bf16.msra.mxu0 %v3117
        %3164 = vmatpush.bf16.msra.mxu0 %v3113
        %3165 = vmatpush.bf16.msra.mxu0 %v3109
        %3166 = vmatpush.bf16.msra.mxu0 %v3105
        %3167 = vmatpush.bf16.msra.mxu0 %v3101
        %3168 = vmatpush.bf16.msra.mxu0 %v3097
        %3169 = vmatmul.bf16.gmra.mxu0 %v2958
        %v3170 = vpop.f32.mrf.mxu0
        %v3171 = vadd.f32 %v2993, %v3170
        %v3172 = vpop.f32.mrf.mxu0
        %3173 = vdwg.mxu0
        %3174 = vmatpush.bf16.msra.mxu0 %v3126
        %3175 = vmatpush.bf16.msra.mxu0 %v3122
        %3176 = vmatpush.bf16.msra.mxu0 %v3118
        %3177 = vmatpush.bf16.msra.mxu0 %v3114
        %3178 = vmatpush.bf16.msra.mxu0 %v3110
        %3179 = vmatpush.bf16.msra.mxu0 %v3106
        %3180 = vmatpush.bf16.msra.mxu0 %v3102
        %3181 = vmatpush.bf16.msra.mxu0 %v3098
        %3182 = vmatmul.bf16.gmra.mxu0 %v2958
        %v3183 = vpop.f32.mrf.mxu0
        %v3184 = vadd.f32 %v2994, %v3183
        %v3185 = vpop.f32.mrf.mxu0
        %3186 = vdwg.mxu0
        %3187 = vmatpush.bf16.msra.mxu0 %v3127
        %3188 = vmatpush.bf16.msra.mxu0 %v3123
        %3189 = vmatpush.bf16.msra.mxu0 %v3119
        %3190 = vmatpush.bf16.msra.mxu0 %v3115
        %3191 = vmatpush.bf16.msra.mxu0 %v3111
        %3192 = vmatpush.bf16.msra.mxu0 %v3107
        %3193 = vmatpush.bf16.msra.mxu0 %v3103
        %3194 = vmatpush.bf16.msra.mxu0 %v3099
        %3195 = vmatmul.bf16.gmra.mxu0 %v2958
        %v3196 = vpop.f32.mrf.mxu0
        %v3197 = vadd.f32 %v2995, %v3196
        %v3198 = vpop.f32.mrf.mxu0
        %3199 = vdwg.mxu0
        %3200 = vmatpush.bf16.msra.mxu0 %v3128
        %3201 = vmatpush.bf16.msra.mxu0 %v3124
        %3202 = vmatpush.bf16.msra.mxu0 %v3120
        %3203 = vmatpush.bf16.msra.mxu0 %v3116
        %3204 = vmatpush.bf16.msra.mxu0 %v3112
        %3205 = vmatpush.bf16.msra.mxu0 %v3108
        %3206 = vmatpush.bf16.msra.mxu0 %v3104
        %3207 = vmatpush.bf16.msra.mxu0 %v3100
        %3208 = vmatmul.bf16.gmra.mxu0 %v2958
        %v3209 = vpop.f32.mrf.mxu0
        %v3210 = vadd.f32 %v2996, %v3209
        %v3211 = vpop.f32.mrf.mxu0
        %3212 = vdwg.mxu0
        %v3213 = vmax.f32 %v3171, 0.0
        %v3214 = vmax.f32 %v3184, 0.0
        %v3215 = vmax.f32 %v3197, 0.0
        %v3216 = vmax.f32 %v3210, 0.0
        %v3217 = vpack.c.bf16 %v3213, %v3213
        %v3218 = vpack.c.bf16 %v3214, %v3214
        %v3219 = vpack.c.bf16 %v3215, %v3215
        %v3220 = vpack.c.bf16 %v3216, %v3216
        %v3221 = vld [vmem:[%s6] sm:$0xf]
        %v3222 = vld [vmem:[%s6 + $0x4] sm:$0xf]
        %v3223 = vld [vmem:[%s6 + $0x8] sm:$0xf]
        %v3224 = vld [vmem:[%s6 + $0xc] sm:$0xf]
        %v3225 = vld [vmem:[%s6 + $0x10] sm:$0xf]
        %v3226 = vld [vmem:[%s6 + $0x14] sm:$0xf]
        %v3227 = vld [vmem:[%s6 + $0x18] sm:$0xf]
        %v3228 = vld [vmem:[%s6 + $0x1c] sm:$0xf]
        %v3229 = vld [vmem:[%s6 + $0x20] sm:$0xf]
        %v3230 = vld [vmem:[%s6 + $0x24] sm:$0xf]
        %v3231 = vld [vmem:[%s6 + $0x28] sm:$0xf]
        %v3232 = vld [vmem:[%s6 + $0x2c] sm:$0xf]
        %v3233 = vld [vmem:[%s6 + $0x30] sm:$0xf]
        %v3234 = vld [vmem:[%s6 + $0x34] sm:$0xf]
        %v3235 = vld [vmem:[%s6 + $0x38] sm:$0xf]
        %v3236 = vld [vmem:[%s6 + $0x3c] sm:$0xf]
        %v3237 = vld [vmem:[%s6 + $0x40] sm:$0xf]
        %v3238 = vld [vmem:[%s6 + $0x44] sm:$0xf]
        %v3239 = vld [vmem:[%s6 + $0x48] sm:$0xf]
        %v3240 = vld [vmem:[%s6 + $0x4c] sm:$0xf]
        %v3241 = vld [vmem:[%s6 + $0x50] sm:$0xf]
        %v3242 = vld [vmem:[%s6 + $0x54] sm:$0xf]
        %v3243 = vld [vmem:[%s6 + $0x58] sm:$0xf]
        %v3244 = vld [vmem:[%s6 + $0x5c] sm:$0xf]
        %v3245 = vld [vmem:[%s6 + $0x60] sm:$0xf]
        %v3246 = vld [vmem:[%s6 + $0x64] sm:$0xf]
        %v3247 = vld [vmem:[%s6 + $0x68] sm:$0xf]
        %v3248 = vld [vmem:[%s6 + $0x6c] sm:$0xf]
        %v3249 = vld [vmem:[%s6 + $0x70] sm:$0xf]
        %v3250 = vld [vmem:[%s6 + $0x74] sm:$0xf]
        %v3251 = vld [vmem:[%s6 + $0x78] sm:$0xf]
        %v3252 = vld [vmem:[%s6 + $0x7c] sm:$0xf]
        %v3253 = vld [vmem:[%s6 + $0x80] sm:$0xf]
        %v3254 = vld [vmem:[%s6 + $0x84] sm:$0xf]
        %v3255 = vld [vmem:[%s6 + $0x88] sm:$0xf]
        %v3256 = vld [vmem:[%s6 + $0x8c] sm:$0xf]
        %v3257 = vld [vmem:[%s6 + $0x90] sm:$0xf]
        %v3258 = vld [vmem:[%s6 + $0x94] sm:$0xf]
        %v3259 = vld [vmem:[%s6 + $0x98] sm:$0xf]
        %v3260 = vld [vmem:[%s6 + $0x9c] sm:$0xf]
        %v3261 = vld [vmem:[%s6 + $0xa0] sm:$0xf]
        %v3262 = vld [vmem:[%s6 + $0xa4] sm:$0xf]
        %v3263 = vld [vmem:[%s6 + $0xa8] sm:$0xf]
        %v3264 = vld [vmem:[%s6 + $0xac] sm:$0xf]
        %v3265 = vld [vmem:[%s6 + $0xb0] sm:$0xf]
        %v3266 = vld [vmem:[%s6 + $0xb4] sm:$0xf]
        %v3267 = vld [vmem:[%s6 + $0xb8] sm:$0xf]
        %v3268 = vld [vmem:[%s6 + $0xbc] sm:$0xf]
        %v3269 = vld [vmem:[%s6 + $0xc0] sm:$0xf]
        %v3270 = vld [vmem:[%s6 + $0xc4] sm:$0xf]
        %v3271 = vld [vmem:[%s6 + $0xc8] sm:$0xf]
        %v3272 = vld [vmem:[%s6 + $0xcc] sm:$0xf]
        %v3273 = vld [vmem:[%s6 + $0xd0] sm:$0xf]
        %v3274 = vld [vmem:[%s6 + $0xd4] sm:$0xf]
        %v3275 = vld [vmem:[%s6 + $0xd8] sm:$0xf]
        %v3276 = vld [vmem:[%s6 + $0xdc] sm:$0xf]
        %v3277 = vld [vmem:[%s6 + $0xe0] sm:$0xf]
        %v3278 = vld [vmem:[%s6 + $0xe4] sm:$0xf]
        %v3279 = vld [vmem:[%s6 + $0xe8] sm:$0xf]
        %v3280 = vld [vmem:[%s6 + $0xec] sm:$0xf]
        %v3281 = vld [vmem:[%s6 + $0xf0] sm:$0xf]
        %v3282 = vld [vmem:[%s6 + $0xf4] sm:$0xf]
        %v3283 = vld [vmem:[%s6 + $0xf8] sm:$0xf]
        %v3284 = vld [vmem:[%s6 + $0xfc] sm:$0xf]
        %v3285 = vld [vmem:[%s7] sm:$0x1]
        %v3287 = vperm.slane %v3285, 0
        %v3353 = vunpack.c.l.b16 %v3221
        %v3354 = vunpack.c.l.b16 %v3222
        %v3355 = vunpack.c.l.b16 %v3223
        %v3356 = vunpack.c.l.b16 %v3224
        %v3357 = vunpack.c.l.b16 %v3225
        %v3358 = vunpack.c.l.b16 %v3226
        %v3359 = vunpack.c.l.b16 %v3227
        %v3360 = vunpack.c.l.b16 %v3228
        %v3361 = vunpack.c.l.b16 %v3229
        %v3362 = vunpack.c.l.b16 %v3230
        %v3363 = vunpack.c.l.b16 %v3231
        %v3364 = vunpack.c.l.b16 %v3232
        %v3365 = vunpack.c.l.b16 %v3233
        %v3366 = vunpack.c.l.b16 %v3234
        %v3367 = vunpack.c.l.b16 %v3235
        %v3368 = vunpack.c.l.b16 %v3236
        %v3369 = vunpack.c.l.b16 %v3237
        %v3370 = vunpack.c.l.b16 %v3238
        %v3371 = vunpack.c.l.b16 %v3239
        %v3372 = vunpack.c.l.b16 %v3240
        %v3373 = vunpack.c.l.b16 %v3241
        %v3374 = vunpack.c.l.b16 %v3242
        %v3375 = vunpack.c.l.b16 %v3243
        %v3376 = vunpack.c.l.b16 %v3244
        %v3377 = vunpack.c.l.b16 %v3245
        %v3378 = vunpack.c.l.b16 %v3246
        %v3379 = vunpack.c.l.b16 %v3247
        %v3380 = vunpack.c.l.b16 %v3248
        %v3381 = vunpack.c.l.b16 %v3249
        %v3382 = vunpack.c.l.b16 %v3250
        %v3383 = vunpack.c.l.b16 %v3251
        %v3384 = vunpack.c.l.b16 %v3252
        %v3385 = vunpack.c.l.b16 %v3253
        %v3386 = vunpack.c.l.b16 %v3254
        %v3387 = vunpack.c.l.b16 %v3255
        %v3388 = vunpack.c.l.b16 %v3256
        %v3389 = vunpack.c.l.b16 %v3257
        %v3390 = vunpack.c.l.b16 %v3258
        %v3391 = vunpack.c.l.b16 %v3259
        %v3392 = vunpack.c.l.b16 %v3260
        %v3393 = vunpack.c.l.b16 %v3261
        %v3394 = vunpack.c.l.b16 %v3262
        %v3395 = vunpack.c.l.b16 %v3263
        %v3396 = vunpack.c.l.b16 %v3264
        %v3397 = vunpack.c.l.b16 %v3265
        %v3398 = vunpack.c.l.b16 %v3266
        %v3399 = vunpack.c.l.b16 %v3267
        %v3400 = vunpack.c.l.b16 %v3268
        %v3401 = vunpack.c.l.b16 %v3269
        %v3402 = vunpack.c.l.b16 %v3270
        %v3403 = vunpack.c.l.b16 %v3271
        %v3404 = vunpack.c.l.b16 %v3272
        %v3405 = vunpack.c.l.b16 %v3273
        %v3406 = vunpack.c.l.b16 %v3274
        %v3407 = vunpack.c.l.b16 %v3275
        %v3408 = vunpack.c.l.b16 %v3276
        %v3409 = vunpack.c.l.b16 %v3277
        %v3410 = vunpack.c.l.b16 %v3278
        %v3411 = vunpack.c.l.b16 %v3279
        %v3412 = vunpack.c.l.b16 %v3280
        %v3413 = vunpack.c.l.b16 %v3281
        %v3414 = vunpack.c.l.b16 %v3282
        %v3415 = vunpack.c.l.b16 %v3283
        %v3416 = vunpack.c.l.b16 %v3284
        %v3417 = vpack.c.b16 %v3354, %v3353
        %v3418 = vpack.c.b16 %v3356, %v3355
        %v3419 = vpack.c.b16 %v3358, %v3357
        %v3420 = vpack.c.b16 %v3360, %v3359
        %v3421 = vpack.c.b16 %v3362, %v3361
        %v3422 = vpack.c.b16 %v3364, %v3363
        %v3423 = vpack.c.b16 %v3366, %v3365
        %v3424 = vpack.c.b16 %v3368, %v3367
        %v3425 = vpack.c.b16 %v3370, %v3369
        %v3426 = vpack.c.b16 %v3372, %v3371
        %v3427 = vpack.c.b16 %v3374, %v3373
        %v3428 = vpack.c.b16 %v3376, %v3375
        %v3429 = vpack.c.b16 %v3378, %v3377
        %v3430 = vpack.c.b16 %v3380, %v3379
        %v3431 = vpack.c.b16 %v3382, %v3381
        %v3432 = vpack.c.b16 %v3384, %v3383
        %v3433 = vpack.c.b16 %v3386, %v3385
        %v3434 = vpack.c.b16 %v3388, %v3387
        %v3435 = vpack.c.b16 %v3390, %v3389
        %v3436 = vpack.c.b16 %v3392, %v3391
        %v3437 = vpack.c.b16 %v3394, %v3393
        %v3438 = vpack.c.b16 %v3396, %v3395
        %v3439 = vpack.c.b16 %v3398, %v3397
        %v3440 = vpack.c.b16 %v3400, %v3399
        %v3441 = vpack.c.b16 %v3402, %v3401
        %v3442 = vpack.c.b16 %v3404, %v3403
        %v3443 = vpack.c.b16 %v3406, %v3405
        %v3444 = vpack.c.b16 %v3408, %v3407
        %v3445 = vpack.c.b16 %v3410, %v3409
        %v3446 = vpack.c.b16 %v3412, %v3411
        %v3447 = vpack.c.b16 %v3414, %v3413
        %v3448 = vpack.c.b16 %v3416, %v3415
        %3481 = vmatpush.bf16.msra.mxu0 %v3424
        %3482 = vmatpush.bf16.msra.mxu0 %v3423
        %3483 = vmatpush.bf16.msra.mxu0 %v3422
        %3484 = vmatpush.bf16.msra.mxu0 %v3421
        %3485 = vmatpush.bf16.msra.mxu0 %v3420
        %3486 = vmatpush.bf16.msra.mxu0 %v3419
        %3487 = vmatpush.bf16.msra.mxu0 %v3418
        %3488 = vmatpush.bf16.msra.mxu0 %v3417
        %3489 = vmatmul.bf16.gmra.mxu0 %v3217
        %v3490 = vpop.f32.mrf.mxu0
        %v3491 = vadd.f32 %v3287, %v3490
        %v3492 = vpop.f32.mrf.mxu0
        %3493 = vdwg.mxu0
        %3494 = vmatpush.bf16.msra.mxu0 %v3432
        %3495 = vmatpush.bf16.msra.mxu0 %v3431
        %3496 = vmatpush.bf16.msra.mxu0 %v3430
        %3497 = vmatpush.bf16.msra.mxu0 %v3429
        %3498 = vmatpush.bf16.msra.mxu0 %v3428
        %3499 = vmatpush.bf16.msra.mxu0 %v3427
        %3500 = vmatpush.bf16.msra.mxu0 %v3426
        %3501 = vmatpush.bf16.msra.mxu0 %v3425
        %3502 = vmatmul.bf16.gmra.mxu0 %v3218
        %v3503 = vpop.f32.mrf.mxu0
        %v3504 = vadd.f32 %v3491, %v3503
        %v3505 = vpop.f32.mrf.mxu0
        %3506 = vdwg.mxu0
        %3507 = vmatpush.bf16.msra.mxu0 %v3440
        %3508 = vmatpush.bf16.msra.mxu0 %v3439
        %3509 = vmatpush.bf16.msra.mxu0 %v3438
        %3510 = vmatpush.bf16.msra.mxu0 %v3437
        %3511 = vmatpush.bf16.msra.mxu0 %v3436
        %3512 = vmatpush.bf16.msra.mxu0 %v3435
        %3513 = vmatpush.bf16.msra.mxu0 %v3434
        %3514 = vmatpush.bf16.msra.mxu0 %v3433
        %3515 = vmatmul.bf16.gmra.mxu0 %v3219
        %v3516 = vpop.f32.mrf.mxu0
        %v3517 = vadd.f32 %v3504, %v3516
        %v3518 = vpop.f32.mrf.mxu0
        %3519 = vdwg.mxu0
        %3520 = vmatpush.bf16.msra.mxu0 %v3448
        %3521 = vmatpush.bf16.msra.mxu0 %v3447
        %3522 = vmatpush.bf16.msra.mxu0 %v3446
        %3523 = vmatpush.bf16.msra.mxu0 %v3445
        %3524 = vmatpush.bf16.msra.mxu0 %v3444
        %3525 = vmatpush.bf16.msra.mxu0 %v3443
        %3526 = vmatpush.bf16.msra.mxu0 %v3442
        %3527 = vmatpush.bf16.msra.mxu0 %v3441
        %3528 = vmatmul.bf16.gmra.mxu0 %v3220
        %v3529 = vpop.f32.mrf.mxu0
        %v3530 = vadd.f32 %v3517, %v3529
        %v3531 = vpop.f32.mrf.mxu0
        %3532 = vdwg.mxu0
        %3533 = vst [vmem:[%s337] sm:$0xff] %v3530
        %s3534 = sand.u32 %s208, 1
        %s3535 = scalar_lea.sflag [#allocation3], %s3534
        %s3536 = sand.u32 %s208, 1
        %s3537 = smul.addr %s3536, 8
        %s3538 = scalar_lea.vmem [#allocation2], %s3537
        %s3539 = sand.u32 %s234, 1
        %s3540 = scalar_lea.sflag [#allocation5], %s3539
        %s3541 = sand.u32 %s234, 1
        %s3542 = smul.addr %s3541, 8
        %s3543 = scalar_lea.vmem [#allocation4], %s3542
        // Predicated region
        $region53: #{simclr_forward.1} parent=51 // pred_check
          %p3544 = pneg %p218
        $region54: #{simclr_forward.1} parent=51 // pred_check_branch
          %3546 = sbr.rel (%p3544) target = $region56
        $region55: #{simclr_forward.1} parent=51 // pred_region
          %3548 = vsyncadd %s3535, 0
          %s3549 = smul.addr %s27, 8
          %s3550 = scalar_lea.hbm %s8, %s3549
          %s3552 = sshll.u32 %s3538, 4
          %s3553 = int_to_ptr.vmem [resolvable:$true] %s3552
          %s3554 = sshll.u32 %s3550, 4
          %s3555 = int_to_ptr.hbm [resolvable:$true] %s3554
          %3557 = dma.vmem_to_hbm [thread:$0]  %s3553, 128, %s3555, %s3535
        $region56: #{simclr_forward.1} parent=51 // pred_fallthru
          _
        // Predicated region
        $region57: #{simclr_forward.1} parent=51 // pred_check
          %p3558 = pneg %p244
        $region58: #{simclr_forward.1} parent=51 // pred_check_branch
          %3560 = sbr.rel (%p3558) target = $region60
        $region59: #{simclr_forward.1} parent=51 // pred_region
          %3562 = vsyncadd %s3540, 0
          %s3563 = smul.addr %s27, 8
          %s3564 = scalar_lea.hbm %s9, %s3563
          %s3566 = sshll.u32 %s3543, 4
          %s3567 = int_to_ptr.vmem [resolvable:$true] %s3566
          %s3568 = sshll.u32 %s3564, 4
          %s3569 = int_to_ptr.hbm [resolvable:$true] %s3568
          %3571 = dma.vmem_to_hbm [thread:$0]  %s3567, 128, %s3569, %s3540
        $region60: #{simclr_forward.1} parent=51 // pred_fallthru
          _
      $region52: #{simclr_forward.1} parent=5 // pred_fallthru
        _
      %p3572 = scmp.le.s32.totalorder 2, %s22
      // Predicated region
      $region61: #{simclr_forward.1} parent=5 // pred_check
        %p3573 = pneg %p3572
      $region62: #{simclr_forward.1} parent=5 // pred_check_branch
        %3575 = sbr.rel (%p3573) target = $region64
      $region63: #{simclr_forward.1} parent=5 // pred_region
        %s3576 = ssub.s32 %s22, 2
        // Predicated region
        $region65: #{simclr_forward.1} parent=63 // pred_check
          %p3577 = pneg %p224
        $region66: #{simclr_forward.1} parent=63 // pred_check_branch
          %3579 = sbr.rel (%p3577) target = $region68
        $region67: #{simclr_forward.1} parent=63 // pred_region
          %s3580 = sand.u32 %s209, 1
          %s3581 = scalar_lea.sflag [#allocation3], %s3580
          %s3582 = sand.u32 %s209, 1
          %s3583 = smul.addr %s3582, 8
          %s3584 = scalar_lea.vmem [#allocation2], %s3583
          %3586 = dma.done %s3581, 128
        $region68: #{simclr_forward.1} parent=63 // pred_fallthru
          _
        // Predicated region
        $region69: #{simclr_forward.1} parent=63 // pred_check
          %p3587 = pneg %p250
        $region70: #{simclr_forward.1} parent=63 // pred_check_branch
          %3589 = sbr.rel (%p3587) target = $region72
        $region71: #{simclr_forward.1} parent=63 // pred_region
          %s3590 = sand.u32 %s235, 1
          %s3591 = scalar_lea.sflag [#allocation5], %s3590
          %s3592 = sand.u32 %s235, 1
          %s3593 = smul.addr %s3592, 8
          %s3594 = scalar_lea.vmem [#allocation4], %s3593
          %3596 = dma.done %s3591, 128
        $region72: #{simclr_forward.1} parent=63 // pred_fallthru
          _
      $region64: #{simclr_forward.1} parent=5 // pred_fallthru
        _
    $region6: #{simclr_forward.1} parent=1 // loop_footer
      %s26 = sadd.s32 1, %s22
    $region7: #{simclr_forward.1} parent=1 // loop_footer_branch
      %21 = sbr.rel target = $region3
    $region8: #{simclr_forward.1} parent=1 // loop_exit
      _
    %3597 = vsyncpa [#allocation3], 1
    %s3598 = scalar_lea.sflag [#allocation3], 1
    %3599 = vsyncpa %s3598, 1
    %3600 = vsyncpa [#allocation5], 1
    %s3601 = scalar_lea.sflag [#allocation5], 1
    %3602 = vsyncpa %s3601, 1

</llo_original>
